<compile_context>
chip_gen: v7x
topology: tpu7x:2x2x1
jax: 0.10.0
libtpu: 0.0.40
codegen_flags: <defaults>
</compile_context>

<pallas_src>
import functools

import jax
import jax.numpy as jnp
from jax.experimental import pallas as pl
from jax.experimental.pallas import tpu as pltpu

HIDDEN = 256      # matches MXU K/N on v6e/v7x
TB = 256          # batch (M) tile: multiple of 256 (v6e/v7x) and of 128 (v5e)
N_LANE = 128      # lane-dense output padding unit


def _round_up(x, m):
    return (x + m - 1) // m * m


def _forward_model_kernel(state_ref, q_ref, w1s_ref, w1q_ref, b1_ref,
                          w2_ref, b2_ref, w3_ref, b3_ref, out_ref):
    # Layer 1: split contraction -- MXU handles state @ w1[:S] (bf16 in, f32 acc),
    # the q column becomes a cheap rank-1 VPU add. Avoids K=S+1 concat entirely.
    h1 = jnp.dot(state_ref[...].astype(jnp.bfloat16), w1s_ref[...],
                 preferred_element_type=jnp.float32)
    h1 = h1 + q_ref[...] * w1q_ref[...] + b1_ref[...]
    h1 = jnp.maximum(h1, 0.0)                                   # ReLU (VPU)

    # Layer 2: 256x256 bf16 matmul, f32 accumulate.
    h2 = jnp.dot(h1.astype(jnp.bfloat16), w2_ref[...],
                 preferred_element_type=jnp.float32) + b2_ref[...]
    h2 = jnp.maximum(h2, 0.0)                                   # ReLU (VPU)

    # Layer 3: lane-dense (N padded to 128) -> unmasked full-lane stores.
    out_ref[...] = jnp.dot(h2.astype(jnp.bfloat16), w3_ref[...],
                           preferred_element_type=jnp.float32) + b3_ref[...]


def prepare_params(params, state_dim):
    """One-time weight layout/dtype prep: split w1, cast matmul weights to bf16,
    zero-pad w3/b3 to a lane-dense output width."""
    n_pad = _round_up(max(state_dim, 1), N_LANE)
    w1 = params["w1"]                                  # (S+1, 256)
    prepared = dict(
        w1s=w1[:state_dim, :].astype(jnp.bfloat16),    # (S, 256)   MXU operand
        w1q=w1[state_dim:state_dim + 1, :].astype(jnp.float32),  # (1, 256) VPU rank-1
        b1=params["b1"].astype(jnp.float32),           # (1, 256)
        w2=params["w2"].astype(jnp.bfloat16),          # (256, 256)
        b2=params["b2"].astype(jnp.float32),           # (1, 256)
        w3p=jnp.pad(params["w3"],
                    ((0, 0), (0, n_pad - state_dim))).astype(jnp.bfloat16),  # (256, n_pad)
        b3p=jnp.pad(params["b3"],
                    ((0, 0), (0, n_pad - state_dim))).astype(jnp.float32),   # (1, n_pad)
    )
    return prepared, n_pad


@functools.partial(jax.jit, static_argnames=("state_dim", "n_pad"))
def _forward_padded(state, q, prepared, *, state_dim, n_pad):
    B = state.shape[0]
    b_pad = _round_up(B, TB)
    if b_pad != B:
        state = jnp.pad(state, ((0, b_pad - B), (0, 0)))
        q = jnp.pad(q, ((0, b_pad - B), (0, 0)))
    grid = (b_pad // TB,)

    flops = 2 * b_pad * (state_dim * HIDDEN + HIDDEN * HIDDEN + HIDDEN * n_pad)
    bytes_accessed = (
        b_pad * state_dim * 4 + b_pad * 4 + b_pad * n_pad * 4
        + sum(int(v.size) * v.dtype.itemsize for v in prepared.values()))

    out = pl.pallas_call(
        _forward_model_kernel,
        out_shape=jax.ShapeDtypeStruct((b_pad, n_pad), jnp.float32),
        grid_spec=pltpu.PrefetchScalarGridSpec(
            num_scalar_prefetch=0,
            grid=grid,
            in_specs=[
                pl.BlockSpec((TB, state_dim), lambda i: (i, 0)),        # state tile
                pl.BlockSpec((TB, 1), lambda i: (i, 0)),                # q tile
                pl.BlockSpec((state_dim, HIDDEN), lambda i: (0, 0)),    # w1s (resident)
                pl.BlockSpec((1, HIDDEN), lambda i: (0, 0)),            # w1q (resident)
                pl.BlockSpec((1, HIDDEN), lambda i: (0, 0)),            # b1  (resident)
                pl.BlockSpec((HIDDEN, HIDDEN), lambda i: (0, 0)),       # w2  (resident)
                pl.BlockSpec((1, HIDDEN), lambda i: (0, 0)),            # b2  (resident)
                pl.BlockSpec((HIDDEN, n_pad), lambda i: (0, 0)),        # w3p (resident)
                pl.BlockSpec((1, n_pad), lambda i: (0, 0)),             # b3p (resident)
            ],
            out_specs=pl.BlockSpec((TB, n_pad), lambda i: (i, 0)),
        ),
        compiler_params=pltpu.CompilerParams(
            dimension_semantics=("parallel",)),
        cost_estimate=pl.CostEstimate(flops=flops, transcendentals=0,
                                      bytes_accessed=bytes_accessed),
    )(state, q, prepared["w1s"], prepared["w1q"], prepared["b1"],
      prepared["w2"], prepared["b2"], prepared["w3p"], prepared["b3p"])

    return out[:B, :state_dim]


def forward_model_pallas(state, q, params):
    """Equivalent of ForwardModel.forward(state, q).

    state: (B, state_dim) f32, q: (B, 1) f32
    params: dict with w1 (S+1,256), b1 (1,256), w2 (256,256), b2 (1,256),
            w3 (256,S), b3 (1,S) -- weights stored (in,out), transposed vs nn.Linear.
    """
    state_dim = state.shape[1]
    prepared, n_pad = prepare_params(params, state_dim)
    return _forward_padded(state, q, prepared, state_dim=state_dim, n_pad=n_pad)


def init_params(key, state_dim):
    """Deterministic init mimicking nn.Linear default (U[-1/sqrt(fan_in), +])."""
    hidden = HIDDEN
    in1 = state_dim + 1
    keys = jax.random.split(key, 6)

    def lin(kw, kb, fan_in, fan_out):
        bound = 1.0 / jnp.sqrt(jnp.float32(fan_in))
        w = jax.random.uniform(kw, (fan_in, fan_out), jnp.float32, -bound, bound)
        b = jax.random.uniform(kb, (1, fan_out), jnp.float32, -bound, bound)
        return w, b

    w1, b1 = lin(keys[0], keys[1], in1, hidden)
    w2, b2 = lin(keys[2], keys[3], hidden, hidden)
    w3, b3 = lin(keys[4], keys[5], hidden, state_dim)
    return dict(w1=w1, b1=b1, w2=w2, b2=b2, w3=w3, b3=b3)


def forward_model_ref(state, q, params):
    """Pure-JAX f32 reference for correctness check."""
    sa = jnp.concatenate([state, q], axis=1)
    h1 = jnp.maximum(sa @ params["w1"] + params["b1"], 0.0)
    h2 = jnp.maximum(h1 @ params["w2"] + params["b2"], 0.0)
    return h2 @ params["w3"] + params["b3"]


if __name__ == "__main__":
    key = jax.random.PRNGKey(0)
    k_state, k_q, k_params = jax.random.split(key, 3)

    batch = 8
    state_dim = 16
    action_dim = 4   # unused by forward (matches the PyTorch module)

    state = jax.random.normal(k_state, (batch, state_dim), jnp.float32)
    q = jax.random.normal(k_q, (batch, 1), jnp.float32)
    params = init_params(k_params, state_dim)

    out = forward_model_pallas(state, q, params)
    out = jax.block_until_ready(out)

    ref = forward_model_ref(state, q, params)
    assert out.shape == (batch, state_dim)
    # bf16 matmul inputs (f32 accumulate) -> relaxed tolerance vs f32 reference.
    max_err = float(jnp.max(jnp.abs(out - ref)))
    assert jnp.allclose(out, ref, atol=5e-2, rtol=5e-2), f"max abs err {max_err}"

    print("KERNEL_OK")
</pallas_src>

<mosaic_0001>
module attributes {stable_mosaic.version = 11 : i64} {
  func.func @_forward_model_kernel(%arg0: i32, %arg1: memref<256x16xf32, #tpu.memory_space<vmem>>, %arg2: memref<256x1xf32, #tpu.memory_space<vmem>>, %arg3: memref<16x256xbf16, #tpu.memory_space<vmem>>, %arg4: memref<1x256xf32, #tpu.memory_space<vmem>>, %arg5: memref<1x256xf32, #tpu.memory_space<vmem>>, %arg6: memref<256x256xbf16, #tpu.memory_space<vmem>>, %arg7: memref<1x256xf32, #tpu.memory_space<vmem>>, %arg8: memref<256x128xbf16, #tpu.memory_space<vmem>>, %arg9: memref<1x128xf32, #tpu.memory_space<vmem>>, %arg10: memref<256x128xf32, #tpu.memory_space<vmem>>) attributes {dimension_semantics = [#tpu.dimension_semantics<parallel>], iteration_bounds = array<i64: 1>, scalar_prefetch = 0 : i64, scratch_operands = 0 : i64, tpu.core_type = #tpu.core_type<tc>, window_params = [{transform_indices = @transform_0, window_bounds = array<i64: 256, 16>}, {transform_indices = @transform_1, window_bounds = array<i64: 256, 1>}, {pipeline_mode = #tpu.pipeline_mode<synchronous>, transform_indices = @transform_2, window_bounds = array<i64: 16, 256>}, {pipeline_mode = #tpu.pipeline_mode<synchronous>, transform_indices = @transform_3, window_bounds = array<i64: 1, 256>}, {pipeline_mode = #tpu.pipeline_mode<synchronous>, transform_indices = @transform_4, window_bounds = array<i64: 1, 256>}, {pipeline_mode = #tpu.pipeline_mode<synchronous>, transform_indices = @transform_5, window_bounds = array<i64: 256, 256>}, {pipeline_mode = #tpu.pipeline_mode<synchronous>, transform_indices = @transform_6, window_bounds = array<i64: 1, 256>}, {pipeline_mode = #tpu.pipeline_mode<synchronous>, transform_indices = @transform_7, window_bounds = array<i64: 256, 128>}, {pipeline_mode = #tpu.pipeline_mode<synchronous>, transform_indices = @transform_8, window_bounds = array<i64: 1, 128>}, {transform_indices = @transform_9, window_bounds = array<i64: 256, 128>}]} {
    %c0 = arith.constant 0 : index
    %c0_0 = arith.constant 0 : index
    %0 = vector.load %arg1[%c0, %c0_0] : memref<256x16xf32, #tpu.memory_space<vmem>>, vector<256x16xf32>
    %1 = arith.truncf %0 : vector<256x16xf32> to vector<256x16xbf16>
    %c0_1 = arith.constant 0 : index
    %c0_2 = arith.constant 0 : index
    %2 = vector.load %arg3[%c0_1, %c0_2] : memref<16x256xbf16, #tpu.memory_space<vmem>>, vector<16x256xbf16>
    %cst = arith.constant dense<0.000000e+00> : vector<256x256xf32>
    %3 = tpu.matmul %1, %2, %cst {dimension_numbers = #tpu.dot_dimension_numbers<[1], [0], [0], [1], [0, 0, 1, 1], [], []>} : vector<256x16xbf16>, vector<16x256xbf16>, vector<256x256xf32> -> vector<256x256xf32>
    %c0_3 = arith.constant 0 : index
    %c0_4 = arith.constant 0 : index
    %4 = vector.load %arg2[%c0_3, %c0_4] : memref<256x1xf32, #tpu.memory_space<vmem>>, vector<256x1xf32>
    %c0_5 = arith.constant 0 : index
    %c0_6 = arith.constant 0 : index
    %5 = vector.load %arg4[%c0_5, %c0_6] : memref<1x256xf32, #tpu.memory_space<vmem>>, vector<1x256xf32>
    %6 = vector.broadcast %4 : vector<256x1xf32> to vector<256x256xf32>
    %7 = vector.broadcast %5 : vector<1x256xf32> to vector<256x256xf32>
    %8 = arith.mulf %6, %7 : vector<256x256xf32>
    %9 = arith.addf %3, %8 : vector<256x256xf32>
    %c0_7 = arith.constant 0 : index
    %c0_8 = arith.constant 0 : index
    %10 = vector.load %arg5[%c0_7, %c0_8] : memref<1x256xf32, #tpu.memory_space<vmem>>, vector<1x256xf32>
    %11 = vector.broadcast %10 : vector<1x256xf32> to vector<256x256xf32>
    %12 = arith.addf %9, %11 : vector<256x256xf32>
    %cst_9 = arith.constant 0.000000e+00 : f32
    %13 = vector.broadcast %cst_9 : f32 to vector<256x256xf32>
    %14 = arith.maximumf %12, %13 : vector<256x256xf32>
    %15 = arith.truncf %14 : vector<256x256xf32> to vector<256x256xbf16>
    %c0_10 = arith.constant 0 : index
    %c0_11 = arith.constant 0 : index
    %16 = vector.load %arg6[%c0_10, %c0_11] : memref<256x256xbf16, #tpu.memory_space<vmem>>, vector<256x256xbf16>
    %cst_12 = arith.constant dense<0.000000e+00> : vector<256x256xf32>
    %17 = tpu.matmul %15, %16, %cst_12 {dimension_numbers = #tpu.dot_dimension_numbers<[1], [0], [0], [1], [0, 0, 1, 1], [], []>} : vector<256x256xbf16>, vector<256x256xbf16>, vector<256x256xf32> -> vector<256x256xf32>
    %c0_13 = arith.constant 0 : index
    %c0_14 = arith.constant 0 : index
    %18 = vector.load %arg7[%c0_13, %c0_14] : memref<1x256xf32, #tpu.memory_space<vmem>>, vector<1x256xf32>
    %19 = vector.broadcast %18 : vector<1x256xf32> to vector<256x256xf32>
    %20 = arith.addf %17, %19 : vector<256x256xf32>
    %cst_15 = arith.constant 0.000000e+00 : f32
    %21 = vector.broadcast %cst_15 : f32 to vector<256x256xf32>
    %22 = arith.maximumf %20, %21 : vector<256x256xf32>
    %23 = arith.truncf %22 : vector<256x256xf32> to vector<256x256xbf16>
    %c0_16 = arith.constant 0 : index
    %c0_17 = arith.constant 0 : index
    %24 = vector.load %arg8[%c0_16, %c0_17] : memref<256x128xbf16, #tpu.memory_space<vmem>>, vector<256x128xbf16>
    %cst_18 = arith.constant dense<0.000000e+00> : vector<256x128xf32>
    %25 = tpu.matmul %23, %24, %cst_18 {dimension_numbers = #tpu.dot_dimension_numbers<[1], [0], [0], [1], [0, 0, 1, 1], [], []>} : vector<256x256xbf16>, vector<256x128xbf16>, vector<256x128xf32> -> vector<256x128xf32>
    %c0_19 = arith.constant 0 : index
    %c0_20 = arith.constant 0 : index
    %26 = vector.load %arg9[%c0_19, %c0_20] : memref<1x128xf32, #tpu.memory_space<vmem>>, vector<1x128xf32>
    %27 = vector.broadcast %26 : vector<1x128xf32> to vector<256x128xf32>
    %28 = arith.addf %25, %27 : vector<256x128xf32>
    %c0_21 = arith.constant 0 : index
    %c0_22 = arith.constant 0 : index
    %29 = vector.load %arg10[%c0_21, %c0_22] : memref<256x128xf32, #tpu.memory_space<vmem>>, vector<256x128xf32>
    tpu.vector_store %arg10[%c0_21, %c0_22], %28 {strides = array<i32>} : memref<256x128xf32, #tpu.memory_space<vmem>>, vector<256x128xf32>,
    return
  }
  func.func @transform_0(%arg0: i32) -> (i32, i32) {
    %c0_i32 = arith.constant 0 : i32
    %c0_i32_0 = arith.constant 0 : i32
    return %arg0, %c0_i32 : i32, i32
  }
  func.func @transform_1(%arg0: i32) -> (i32, i32) {
    %c0_i32 = arith.constant 0 : i32
    %c0_i32_0 = arith.constant 0 : i32
    return %arg0, %c0_i32 : i32, i32
  }
  func.func @transform_2(%arg0: i32) -> (i32, i32) {
    %c0_i32 = arith.constant 0 : i32
    %c0_i32_0 = arith.constant 0 : i32
    %c0_i32_1 = arith.constant 0 : i32
    return %c0_i32, %c0_i32_0 : i32, i32
  }
  func.func @transform_3(%arg0: i32) -> (i32, i32) {
    %c0_i32 = arith.constant 0 : i32
    %c0_i32_0 = arith.constant 0 : i32
    %c0_i32_1 = arith.constant 0 : i32
    return %c0_i32, %c0_i32_0 : i32, i32
  }
  func.func @transform_4(%arg0: i32) -> (i32, i32) {
    %c0_i32 = arith.constant 0 : i32
    %c0_i32_0 = arith.constant 0 : i32
    %c0_i32_1 = arith.constant 0 : i32
    return %c0_i32, %c0_i32_0 : i32, i32
  }
  func.func @transform_5(%arg0: i32) -> (i32, i32) {
    %c0_i32 = arith.constant 0 : i32
    %c0_i32_0 = arith.constant 0 : i32
    %c0_i32_1 = arith.constant 0 : i32
    return %c0_i32, %c0_i32_0 : i32, i32
  }
  func.func @transform_6(%arg0: i32) -> (i32, i32) {
    %c0_i32 = arith.constant 0 : i32
    %c0_i32_0 = arith.constant 0 : i32
    %c0_i32_1 = arith.constant 0 : i32
    return %c0_i32, %c0_i32_0 : i32, i32
  }
  func.func @transform_7(%arg0: i32) -> (i32, i32) {
    %c0_i32 = arith.constant 0 : i32
    %c0_i32_0 = arith.constant 0 : i32
    %c0_i32_1 = arith.constant 0 : i32
    return %c0_i32, %c0_i32_0 : i32, i32
  }
  func.func @transform_8(%arg0: i32) -> (i32, i32) {
    %c0_i32 = arith.constant 0 : i32
    %c0_i32_0 = arith.constant 0 : i32
    %c0_i32_1 = arith.constant 0 : i32
    return %c0_i32, %c0_i32_0 : i32, i32
  }
  func.func @transform_9(%arg0: i32) -> (i32, i32) {
    %c0_i32 = arith.constant 0 : i32
    %c0_i32_0 = arith.constant 0 : i32
    return %arg0, %c0_i32 : i32, i32
  }
}

</mosaic_0001>

<llo_original>
// kernel: _forward_padded.1
$region0: #{_forward_padded.1}
  #allocation0 [shape = 'u32[]', space=smem, size = 0x4, offset = 0x4, fixed_abs, tag = 'smem constant byte address 0x4 - core index']
  #allocation1 [shape = 'u32[144,128]{1,0:T(1,128)}', space=vmem, size = 0x12000, scoped, tag = 'internal scratch']
  %s0 = inlined_call_operand.vmem [shape: f32[256,16], index: 0, kind: input, shape index: {}]
  %s1 = inlined_call_operand.vmem [shape: f32[256,1], index: 1, kind: input, shape index: {}]
  %s2 = inlined_call_operand.vmem [shape: bf16[16,256], index: 2, kind: input, shape index: {}]
  %s3 = inlined_call_operand.vmem [shape: f32[1,256], index: 3, kind: input, shape index: {}]
  %s4 = inlined_call_operand.vmem [shape: f32[1,256], index: 4, kind: input, shape index: {}]
  %s5 = inlined_call_operand.vmem [shape: bf16[256,256], index: 5, kind: input, shape index: {}]
  %s6 = inlined_call_operand.vmem [shape: f32[1,256], index: 6, kind: input, shape index: {}]
  %s7 = inlined_call_operand.vmem [shape: bf16[256,128], index: 7, kind: input, shape index: {}]
  %s8 = inlined_call_operand.vmem [shape: f32[1,128], index: 8, kind: input, shape index: {}]
  %s9 = inlined_call_operand.vmem [shape: f32[256,128], index: 9, kind: output, shape index: {}]
  %s10 = sld [smem:[#allocation0]]
  $region46: #{_forward_padded.1} parent=0
    _
  %s12 = ssub.s32 1, %s10
  %s13 = scalar_select 0, %s12, %s10
  // Predicated region
  $region2: #{_forward_padded.1} parent=0 // pred_check
    _
  $region3: #{_forward_padded.1} parent=0 // pred_check_branch
    %15 = sbr.rel (0) target = $region5
  $region4: #{_forward_padded.1} parent=0 // pred_region
    _
  $region5: #{_forward_padded.1} parent=0 // pred_fallthru
    _
  // Predicated region
  $region6: #{_forward_padded.1} parent=0 // pred_check
    _
  $region7: #{_forward_padded.1} parent=0 // pred_check_branch
    %17 = sbr.rel (0) target = $region9
  $region8: #{_forward_padded.1} parent=0 // pred_region
    _
  $region9: #{_forward_padded.1} parent=0 // pred_fallthru
    _
  // Predicated region
  $region10: #{_forward_padded.1} parent=0 // pred_check
    _
  $region11: #{_forward_padded.1} parent=0 // pred_check_branch
    %19 = sbr.rel (0) target = $region13
  $region12: #{_forward_padded.1} parent=0 // pred_region
    _
  $region13: #{_forward_padded.1} parent=0 // pred_fallthru
    _
  // Predicated region
  $region14: #{_forward_padded.1} parent=0 // pred_check
    _
  $region15: #{_forward_padded.1} parent=0 // pred_check_branch
    %21 = sbr.rel (0) target = $region17
  $region16: #{_forward_padded.1} parent=0 // pred_region
    _
  $region17: #{_forward_padded.1} parent=0 // pred_fallthru
    _
  // Predicated region
  $region18: #{_forward_padded.1} parent=0 // pred_check
    _
  $region19: #{_forward_padded.1} parent=0 // pred_check_branch
    %23 = sbr.rel (0) target = $region21
  $region20: #{_forward_padded.1} parent=0 // pred_region
    _
  $region21: #{_forward_padded.1} parent=0 // pred_fallthru
    _
  // Predicated region
  $region22: #{_forward_padded.1} parent=0 // pred_check
    _
  $region23: #{_forward_padded.1} parent=0 // pred_check_branch
    %25 = sbr.rel (0) target = $region25
  $region24: #{_forward_padded.1} parent=0 // pred_region
    _
  $region25: #{_forward_padded.1} parent=0 // pred_fallthru
    _
  // Predicated region
  $region26: #{_forward_padded.1} parent=0 // pred_check
    _
  $region27: #{_forward_padded.1} parent=0 // pred_check_branch
    %27 = sbr.rel (0) target = $region29
  $region28: #{_forward_padded.1} parent=0 // pred_region
    _
  $region29: #{_forward_padded.1} parent=0 // pred_fallthru
    _
  // Predicated region
  $region30: #{_forward_padded.1} parent=0 // pred_check
    _
  $region31: #{_forward_padded.1} parent=0 // pred_check_branch
    %29 = sbr.rel (0) target = $region33
  $region32: #{_forward_padded.1} parent=0 // pred_region
    _
  $region33: #{_forward_padded.1} parent=0 // pred_fallthru
    _
  // Predicated region
  $region34: #{_forward_padded.1} parent=0 // pred_check
    _
  $region35: #{_forward_padded.1} parent=0 // pred_check_branch
    %31 = sbr.rel (0) target = $region37
  $region36: #{_forward_padded.1} parent=0 // pred_region
    _
  $region37: #{_forward_padded.1} parent=0 // pred_fallthru
    _
  %v33 = vld [vmem:[%s0] sm:$0xff]
  %v34 = vld [vmem:[%s0 + $0x8] sm:$0xff]
  %v35 = vld [vmem:[%s0 + $0x10] sm:$0xff]
  %v36 = vld [vmem:[%s0 + $0x18] sm:$0xff]
  %v37 = vld [vmem:[%s0 + $0x20] sm:$0xff]
  %v38 = vld [vmem:[%s0 + $0x28] sm:$0xff]
  %v39 = vld [vmem:[%s0 + $0x30] sm:$0xff]
  %v40 = vld [vmem:[%s0 + $0x38] sm:$0xff]
  %v41 = vld [vmem:[%s0 + $0x40] sm:$0xff]
  %v42 = vld [vmem:[%s0 + $0x48] sm:$0xff]
  %v43 = vld [vmem:[%s0 + $0x50] sm:$0xff]
  %v44 = vld [vmem:[%s0 + $0x58] sm:$0xff]
  %v45 = vld [vmem:[%s0 + $0x60] sm:$0xff]
  %v46 = vld [vmem:[%s0 + $0x68] sm:$0xff]
  %v47 = vld [vmem:[%s0 + $0x70] sm:$0xff]
  %v48 = vld [vmem:[%s0 + $0x78] sm:$0xff]
  %v49 = vld [vmem:[%s0 + $0x80] sm:$0xff]
  %v50 = vld [vmem:[%s0 + $0x88] sm:$0xff]
  %v51 = vld [vmem:[%s0 + $0x90] sm:$0xff]
  %v52 = vld [vmem:[%s0 + $0x98] sm:$0xff]
  %v53 = vld [vmem:[%s0 + $0xa0] sm:$0xff]
  %v54 = vld [vmem:[%s0 + $0xa8] sm:$0xff]
  %v55 = vld [vmem:[%s0 + $0xb0] sm:$0xff]
  %v56 = vld [vmem:[%s0 + $0xb8] sm:$0xff]
  %v57 = vld [vmem:[%s0 + $0xc0] sm:$0xff]
  %v58 = vld [vmem:[%s0 + $0xc8] sm:$0xff]
  %v59 = vld [vmem:[%s0 + $0xd0] sm:$0xff]
  %v60 = vld [vmem:[%s0 + $0xd8] sm:$0xff]
  %v61 = vld [vmem:[%s0 + $0xe0] sm:$0xff]
  %v62 = vld [vmem:[%s0 + $0xe8] sm:$0xff]
  %v63 = vld [vmem:[%s0 + $0xf0] sm:$0xff]
  %v64 = vld [vmem:[%s0 + $0xf8] sm:$0xff]
  %v65 = vpack.c.bf16 %v34, %v33
  %v66 = vpack.c.bf16 %v36, %v35
  %v67 = vpack.c.bf16 %v38, %v37
  %v68 = vpack.c.bf16 %v40, %v39
  %v69 = vpack.c.bf16 %v42, %v41
  %v70 = vpack.c.bf16 %v44, %v43
  %v71 = vpack.c.bf16 %v46, %v45
  %v72 = vpack.c.bf16 %v48, %v47
  %v73 = vpack.c.bf16 %v50, %v49
  %v74 = vpack.c.bf16 %v52, %v51
  %v75 = vpack.c.bf16 %v54, %v53
  %v76 = vpack.c.bf16 %v56, %v55
  %v77 = vpack.c.bf16 %v58, %v57
  %v78 = vpack.c.bf16 %v60, %v59
  %v79 = vpack.c.bf16 %v62, %v61
  %v80 = vpack.c.bf16 %v64, %v63
  %v81 = vld [vmem:[%s2] sm:$0xff]
  %v82 = vld [vmem:[%s2 + $0x8] sm:$0xff]
  %v83 = vld [vmem:[%s1] sm:$0xff]
  %v84 = vld [vmem:[%s1 + $0x8] sm:$0xff]
  %v85 = vld [vmem:[%s1 + $0x10] sm:$0xff]
  %v86 = vld [vmem:[%s1 + $0x18] sm:$0xff]
  %v87 = vld [vmem:[%s1 + $0x20] sm:$0xff]
  %v88 = vld [vmem:[%s1 + $0x28] sm:$0xff]
  %v89 = vld [vmem:[%s1 + $0x30] sm:$0xff]
  %v90 = vld [vmem:[%s1 + $0x38] sm:$0xff]
  %v91 = vld [vmem:[%s1 + $0x40] sm:$0xff]
  %v92 = vld [vmem:[%s1 + $0x48] sm:$0xff]
  %v93 = vld [vmem:[%s1 + $0x50] sm:$0xff]
  %v94 = vld [vmem:[%s1 + $0x58] sm:$0xff]
  %v95 = vld [vmem:[%s1 + $0x60] sm:$0xff]
  %v96 = vld [vmem:[%s1 + $0x68] sm:$0xff]
  %v97 = vld [vmem:[%s1 + $0x70] sm:$0xff]
  %v98 = vld [vmem:[%s1 + $0x78] sm:$0xff]
  %v99 = vld [vmem:[%s1 + $0x80] sm:$0xff]
  %v100 = vld [vmem:[%s1 + $0x88] sm:$0xff]
  %v101 = vld [vmem:[%s1 + $0x90] sm:$0xff]
  %v102 = vld [vmem:[%s1 + $0x98] sm:$0xff]
  %v103 = vld [vmem:[%s1 + $0xa0] sm:$0xff]
  %v104 = vld [vmem:[%s1 + $0xa8] sm:$0xff]
  %v105 = vld [vmem:[%s1 + $0xb0] sm:$0xff]
  %v106 = vld [vmem:[%s1 + $0xb8] sm:$0xff]
  %v107 = vld [vmem:[%s1 + $0xc0] sm:$0xff]
  %v108 = vld [vmem:[%s1 + $0xc8] sm:$0xff]
  %v109 = vld [vmem:[%s1 + $0xd0] sm:$0xff]
  %v110 = vld [vmem:[%s1 + $0xd8] sm:$0xff]
  %v111 = vld [vmem:[%s1 + $0xe0] sm:$0xff]
  %v112 = vld [vmem:[%s1 + $0xe8] sm:$0xff]
  %v113 = vld [vmem:[%s1 + $0xf0] sm:$0xff]
  %v114 = vld [vmem:[%s1 + $0xf8] sm:$0xff]
  %v115 = vld [vmem:[%s3] sm:$0x3]
  %117 = vset.pattern.permute.xlu0 0
  %118 = vperm.xlu0 %117, %v83
  %v119 = vpop.permute.xlu0 %118
  %122 = vset.pattern.permute.xlu0 0
  %123 = vperm.xlu0 %122, %v84
  %v124 = vpop.permute.xlu0 %123
  %127 = vset.pattern.permute.xlu0 0
  %128 = vperm.xlu0 %127, %v85
  %v129 = vpop.permute.xlu0 %128
  %132 = vset.pattern.permute.xlu0 0
  %133 = vperm.xlu0 %132, %v86
  %v134 = vpop.permute.xlu0 %133
  %137 = vset.pattern.permute.xlu0 0
  %138 = vperm.xlu0 %137, %v87
  %v139 = vpop.permute.xlu0 %138
  %142 = vset.pattern.permute.xlu0 0
  %143 = vperm.xlu0 %142, %v88
  %v144 = vpop.permute.xlu0 %143
  %147 = vset.pattern.permute.xlu0 0
  %148 = vperm.xlu0 %147, %v89
  %v149 = vpop.permute.xlu0 %148
  %152 = vset.pattern.permute.xlu0 0
  %153 = vperm.xlu0 %152, %v90
  %v154 = vpop.permute.xlu0 %153
  %157 = vset.pattern.permute.xlu0 0
  %158 = vperm.xlu0 %157, %v91
  %v159 = vpop.permute.xlu0 %158
  %162 = vset.pattern.permute.xlu0 0
  %163 = vperm.xlu0 %162, %v92
  %v164 = vpop.permute.xlu0 %163
  %167 = vset.pattern.permute.xlu0 0
  %168 = vperm.xlu0 %167, %v93
  %v169 = vpop.permute.xlu0 %168
  %172 = vset.pattern.permute.xlu0 0
  %173 = vperm.xlu0 %172, %v94
  %v174 = vpop.permute.xlu0 %173
  %177 = vset.pattern.permute.xlu0 0
  %178 = vperm.xlu0 %177, %v95
  %v179 = vpop.permute.xlu0 %178
  %182 = vset.pattern.permute.xlu0 0
  %183 = vperm.xlu0 %182, %v96
  %v184 = vpop.permute.xlu0 %183
  %187 = vset.pattern.permute.xlu0 0
  %188 = vperm.xlu0 %187, %v97
  %v189 = vpop.permute.xlu0 %188
  %192 = vset.pattern.permute.xlu0 0
  %193 = vperm.xlu0 %192, %v98
  %v194 = vpop.permute.xlu0 %193
  %197 = vset.pattern.permute.xlu0 0
  %198 = vperm.xlu0 %197, %v99
  %v199 = vpop.permute.xlu0 %198
  %202 = vset.pattern.permute.xlu0 0
  %203 = vperm.xlu0 %202, %v100
  %v204 = vpop.permute.xlu0 %203
  %207 = vset.pattern.permute.xlu0 0
  %208 = vperm.xlu0 %207, %v101
  %v209 = vpop.permute.xlu0 %208
  %212 = vset.pattern.permute.xlu0 0
  %213 = vperm.xlu0 %212, %v102
  %v214 = vpop.permute.xlu0 %213
  %217 = vset.pattern.permute.xlu0 0
  %218 = vperm.xlu0 %217, %v103
  %v219 = vpop.permute.xlu0 %218
  %222 = vset.pattern.permute.xlu0 0
  %223 = vperm.xlu0 %222, %v104
  %v224 = vpop.permute.xlu0 %223
  %227 = vset.pattern.permute.xlu0 0
  %228 = vperm.xlu0 %227, %v105
  %v229 = vpop.permute.xlu0 %228
  %232 = vset.pattern.permute.xlu0 0
  %233 = vperm.xlu0 %232, %v106
  %v234 = vpop.permute.xlu0 %233
  %237 = vset.pattern.permute.xlu0 0
  %238 = vperm.xlu0 %237, %v107
  %v239 = vpop.permute.xlu0 %238
  %242 = vset.pattern.permute.xlu0 0
  %243 = vperm.xlu0 %242, %v108
  %v244 = vpop.permute.xlu0 %243
  %247 = vset.pattern.permute.xlu0 0
  %248 = vperm.xlu0 %247, %v109
  %v249 = vpop.permute.xlu0 %248
  %252 = vset.pattern.permute.xlu0 0
  %253 = vperm.xlu0 %252, %v110
  %v254 = vpop.permute.xlu0 %253
  %257 = vset.pattern.permute.xlu0 0
  %258 = vperm.xlu0 %257, %v111
  %v259 = vpop.permute.xlu0 %258
  %262 = vset.pattern.permute.xlu0 0
  %263 = vperm.xlu0 %262, %v112
  %v264 = vpop.permute.xlu0 %263
  %267 = vset.pattern.permute.xlu0 0
  %268 = vperm.xlu0 %267, %v113
  %v269 = vpop.permute.xlu0 %268
  %272 = vset.pattern.permute.xlu0 0
  %273 = vperm.xlu0 %272, %v114
  %v274 = vpop.permute.xlu0 %273
  %v277 = vlaneseq
  %v278 = vshrl.u32 %v277, 7
  %v279 = vsub.s32 0, %v278
  %v280 = vrot.slane %v115, %v279
  %v281 = vlaneseq
  %v282 = vshrl.u32 %v281, 7
  %v283 = vsub.s32 1, %v282
  %v284 = vrot.slane %v115, %v283
  %v287 = vmul.f32 %v119, %v280
  %v288 = vmul.f32 %v119, %v284
  %v289 = vmul.f32 %v124, %v280
  %v290 = vmul.f32 %v124, %v284
  %v291 = vmul.f32 %v129, %v280
  %v292 = vmul.f32 %v129, %v284
  %v293 = vmul.f32 %v134, %v280
  %v294 = vmul.f32 %v134, %v284
  %v295 = vmul.f32 %v139, %v280
  %v296 = vmul.f32 %v139, %v284
  %v297 = vmul.f32 %v144, %v280
  %v298 = vmul.f32 %v144, %v284
  %v299 = vmul.f32 %v149, %v280
  %v300 = vmul.f32 %v149, %v284
  %v301 = vmul.f32 %v154, %v280
  %v302 = vmul.f32 %v154, %v284
  %v303 = vmul.f32 %v159, %v280
  %v304 = vmul.f32 %v159, %v284
  %v305 = vmul.f32 %v164, %v280
  %v306 = vmul.f32 %v164, %v284
  %v307 = vmul.f32 %v169, %v280
  %v308 = vmul.f32 %v169, %v284
  %v309 = vmul.f32 %v174, %v280
  %v310 = vmul.f32 %v174, %v284
  %v311 = vmul.f32 %v179, %v280
  %v312 = vmul.f32 %v179, %v284
  %v313 = vmul.f32 %v184, %v280
  %v314 = vmul.f32 %v184, %v284
  %v315 = vmul.f32 %v189, %v280
  %v316 = vmul.f32 %v189, %v284
  %v317 = vmul.f32 %v194, %v280
  %v318 = vmul.f32 %v194, %v284
  %v319 = vmul.f32 %v199, %v280
  %v320 = vmul.f32 %v199, %v284
  %v321 = vmul.f32 %v204, %v280
  %v322 = vmul.f32 %v204, %v284
  %v323 = vmul.f32 %v209, %v280
  %v324 = vmul.f32 %v209, %v284
  %v325 = vmul.f32 %v214, %v280
  %v326 = vmul.f32 %v214, %v284
  %v327 = vmul.f32 %v219, %v280
  %v328 = vmul.f32 %v219, %v284
  %v329 = vmul.f32 %v224, %v280
  %v330 = vmul.f32 %v224, %v284
  %v331 = vmul.f32 %v229, %v280
  %v332 = vmul.f32 %v229, %v284
  %v333 = vmul.f32 %v234, %v280
  %v334 = vmul.f32 %v234, %v284
  %v335 = vmul.f32 %v239, %v280
  %v336 = vmul.f32 %v239, %v284
  %v337 = vmul.f32 %v244, %v280
  %v338 = vmul.f32 %v244, %v284
  %v339 = vmul.f32 %v249, %v280
  %v340 = vmul.f32 %v249, %v284
  %v341 = vmul.f32 %v254, %v280
  %v342 = vmul.f32 %v254, %v284
  %v343 = vmul.f32 %v259, %v280
  %v344 = vmul.f32 %v259, %v284
  %v345 = vmul.f32 %v264, %v280
  %v346 = vmul.f32 %v264, %v284
  %v347 = vmul.f32 %v269, %v280
  %v348 = vmul.f32 %v269, %v284
  %v349 = vmul.f32 %v274, %v280
  %v350 = vmul.f32 %v274, %v284
  %v353 = vunpack.c.l.b16 %v81
  %v354 = vunpack.c.h.b16 %v81
  %v355 = vunpack.c.l.b16 %v82
  %v356 = vunpack.c.h.b16 %v82
  %v357 = vpack.c.b16 %v355, %v353
  %v358 = vpack.c.b16 %v356, %v354
  %vm361 = vcmask 130048
  %v363 = vsel %vm361, %v65, 0
  %v366 = vsel %vm361, %v66, 0
  %v369 = vsel %vm361, %v67, 0
  %v372 = vsel %vm361, %v68, 0
  %v375 = vsel %vm361, %v69, 0
  %v378 = vsel %vm361, %v70, 0
  %v381 = vsel %vm361, %v71, 0
  %v384 = vsel %vm361, %v72, 0
  %v387 = vsel %vm361, %v73, 0
  %v390 = vsel %vm361, %v74, 0
  %v393 = vsel %vm361, %v75, 0
  %v396 = vsel %vm361, %v76, 0
  %v399 = vsel %vm361, %v77, 0
  %v402 = vsel %vm361, %v78, 0
  %v405 = vsel %vm361, %v79, 0
  %v408 = vsel %vm361, %v80, 0
  %410 = vmatprep.subr.bf16.mxu0 %v358
  %411 = vmatpush1.bf16.msra.mxu0 %v357
  %412 = vmatprep.subr.bf16.mxu0 0
  %413 = vmatpush1.bf16.msra.mxu0 0
  %414 = vmatprep.subr.bf16.mxu0 0
  %415 = vmatpush1.bf16.msra.mxu0 0
  %416 = vmatprep.subr.bf16.mxu0 0
  %417 = vmatpush1.bf16.msra.mxu0 0
  %418 = vmatprep.subr.bf16.mxu0 0
  %419 = vmatpush1.bf16.msra.mxu0 0
  %420 = vmatprep.subr.bf16.mxu0 0
  %421 = vmatpush1.bf16.msra.mxu0 0
  %422 = vmatprep.subr.bf16.mxu0 0
  %423 = vmatpush1.bf16.msra.mxu0 0
  %424 = vmatprep.subr.bf16.mxu0 0
  %425 = vmatpush1.bf16.msra.mxu0 0
  %426 = vmatprep.subr.bf16.mxu0 0
  %427 = vmatpush1.bf16.msra.mxu0 0
  %428 = vmatprep.subr.bf16.mxu0 0
  %429 = vmatpush1.bf16.msra.mxu0 0
  %430 = vmatprep.subr.bf16.mxu0 0
  %431 = vmatpush1.bf16.msra.mxu0 0
  %432 = vmatprep.subr.bf16.mxu0 0
  %433 = vmatpush1.bf16.msra.mxu0 0
  %434 = vmatprep.subr.bf16.mxu0 0
  %435 = vmatpush1.bf16.msra.mxu0 0
  %436 = vmatprep.subr.bf16.mxu0 0
  %437 = vmatpush1.bf16.msra.mxu0 0
  %438 = vmatprep.subr.bf16.mxu0 0
  %439 = vmatpush1.bf16.msra.mxu0 0
  %440 = vmatprep.subr.bf16.mxu0 0
  %441 = vmatpush1.bf16.msra.mxu0 0
  %442 = vmatprep.mubr.bf16.mxu0 0
  %443 = vmatmul.mubr.bf16.gmra.mrb[0].mxu0 %v363
  %v444 = vpop.f32.mrb[0].mxu0
  %v445 = vadd.f32 %v287, %v444
  %v446 = vpop.f32.mrb[0].mxu0
  %v447 = vadd.f32 %v288, %v446
  %v448 = vpop.f32.mrb[0].mxu0
  %v449 = vadd.f32 %v289, %v448
  %v450 = vpop.f32.mrb[0].mxu0
  %v451 = vadd.f32 %v290, %v450
  %452 = vmatprep.mubr.bf16.mxu0 0
  %453 = vmatmul.mubr.bf16.gmra.mrb[0].mxu0 %v366
  %v454 = vpop.f32.mrb[0].mxu0
  %v455 = vadd.f32 %v291, %v454
  %v456 = vpop.f32.mrb[0].mxu0
  %v457 = vadd.f32 %v292, %v456
  %v458 = vpop.f32.mrb[0].mxu0
  %v459 = vadd.f32 %v293, %v458
  %v460 = vpop.f32.mrb[0].mxu0
  %v461 = vadd.f32 %v294, %v460
  %462 = vmatprep.mubr.bf16.mxu0 0
  %463 = vmatmul.mubr.bf16.gmra.mrb[0].mxu0 %v369
  %v464 = vpop.f32.mrb[0].mxu0
  %v465 = vadd.f32 %v295, %v464
  %v466 = vpop.f32.mrb[0].mxu0
  %v467 = vadd.f32 %v296, %v466
  %v468 = vpop.f32.mrb[0].mxu0
  %v469 = vadd.f32 %v297, %v468
  %v470 = vpop.f32.mrb[0].mxu0
  %v471 = vadd.f32 %v298, %v470
  %472 = vmatprep.mubr.bf16.mxu0 0
  %473 = vmatmul.mubr.bf16.gmra.mrb[0].mxu0 %v372
  %v474 = vpop.f32.mrb[0].mxu0
  %v475 = vadd.f32 %v299, %v474
  %v476 = vpop.f32.mrb[0].mxu0
  %v477 = vadd.f32 %v300, %v476
  %v478 = vpop.f32.mrb[0].mxu0
  %v479 = vadd.f32 %v301, %v478
  %v480 = vpop.f32.mrb[0].mxu0
  %v481 = vadd.f32 %v302, %v480
  %482 = vmatprep.mubr.bf16.mxu0 0
  %483 = vmatmul.mubr.bf16.gmra.mrb[0].mxu0 %v375
  %v484 = vpop.f32.mrb[0].mxu0
  %v485 = vadd.f32 %v303, %v484
  %v486 = vpop.f32.mrb[0].mxu0
  %v487 = vadd.f32 %v304, %v486
  %v488 = vpop.f32.mrb[0].mxu0
  %v489 = vadd.f32 %v305, %v488
  %v490 = vpop.f32.mrb[0].mxu0
  %v491 = vadd.f32 %v306, %v490
  %492 = vmatprep.mubr.bf16.mxu0 0
  %493 = vmatmul.mubr.bf16.gmra.mrb[0].mxu0 %v378
  %v494 = vpop.f32.mrb[0].mxu0
  %v495 = vadd.f32 %v307, %v494
  %v496 = vpop.f32.mrb[0].mxu0
  %v497 = vadd.f32 %v308, %v496
  %v498 = vpop.f32.mrb[0].mxu0
  %v499 = vadd.f32 %v309, %v498
  %v500 = vpop.f32.mrb[0].mxu0
  %v501 = vadd.f32 %v310, %v500
  %502 = vmatprep.mubr.bf16.mxu0 0
  %503 = vmatmul.mubr.bf16.gmra.mrb[0].mxu0 %v381
  %v504 = vpop.f32.mrb[0].mxu0
  %v505 = vadd.f32 %v311, %v504
  %v506 = vpop.f32.mrb[0].mxu0
  %v507 = vadd.f32 %v312, %v506
  %v508 = vpop.f32.mrb[0].mxu0
  %v509 = vadd.f32 %v313, %v508
  %v510 = vpop.f32.mrb[0].mxu0
  %v511 = vadd.f32 %v314, %v510
  %512 = vmatprep.mubr.bf16.mxu0 0
  %513 = vmatmul.mubr.bf16.gmra.mrb[0].mxu0 %v384
  %v514 = vpop.f32.mrb[0].mxu0
  %v515 = vadd.f32 %v315, %v514
  %v516 = vpop.f32.mrb[0].mxu0
  %v517 = vadd.f32 %v316, %v516
  %v518 = vpop.f32.mrb[0].mxu0
  %v519 = vadd.f32 %v317, %v518
  %v520 = vpop.f32.mrb[0].mxu0
  %v521 = vadd.f32 %v318, %v520
  %522 = vmatprep.mubr.bf16.mxu0 0
  %523 = vmatmul.mubr.bf16.gmra.mrb[0].mxu0 %v387
  %v524 = vpop.f32.mrb[0].mxu0
  %v525 = vadd.f32 %v319, %v524
  %v526 = vpop.f32.mrb[0].mxu0
  %v527 = vadd.f32 %v320, %v526
  %v528 = vpop.f32.mrb[0].mxu0
  %v529 = vadd.f32 %v321, %v528
  %v530 = vpop.f32.mrb[0].mxu0
  %v531 = vadd.f32 %v322, %v530
  %532 = vmatprep.mubr.bf16.mxu0 0
  %533 = vmatmul.mubr.bf16.gmra.mrb[0].mxu0 %v390
  %v534 = vpop.f32.mrb[0].mxu0
  %v535 = vadd.f32 %v323, %v534
  %v536 = vpop.f32.mrb[0].mxu0
  %v537 = vadd.f32 %v324, %v536
  %v538 = vpop.f32.mrb[0].mxu0
  %v539 = vadd.f32 %v325, %v538
  %v540 = vpop.f32.mrb[0].mxu0
  %v541 = vadd.f32 %v326, %v540
  %542 = vmatprep.mubr.bf16.mxu0 0
  %543 = vmatmul.mubr.bf16.gmra.mrb[0].mxu0 %v393
  %v544 = vpop.f32.mrb[0].mxu0
  %v545 = vadd.f32 %v327, %v544
  %v546 = vpop.f32.mrb[0].mxu0
  %v547 = vadd.f32 %v328, %v546
  %v548 = vpop.f32.mrb[0].mxu0
  %v549 = vadd.f32 %v329, %v548
  %v550 = vpop.f32.mrb[0].mxu0
  %v551 = vadd.f32 %v330, %v550
  %552 = vmatprep.mubr.bf16.mxu0 0
  %553 = vmatmul.mubr.bf16.gmra.mrb[0].mxu0 %v396
  %v554 = vpop.f32.mrb[0].mxu0
  %v555 = vadd.f32 %v331, %v554
  %v556 = vpop.f32.mrb[0].mxu0
  %v557 = vadd.f32 %v332, %v556
  %v558 = vpop.f32.mrb[0].mxu0
  %v559 = vadd.f32 %v333, %v558
  %v560 = vpop.f32.mrb[0].mxu0
  %v561 = vadd.f32 %v334, %v560
  %562 = vmatprep.mubr.bf16.mxu0 0
  %563 = vmatmul.mubr.bf16.gmra.mrb[0].mxu0 %v399
  %v564 = vpop.f32.mrb[0].mxu0
  %v565 = vadd.f32 %v335, %v564
  %v566 = vpop.f32.mrb[0].mxu0
  %v567 = vadd.f32 %v336, %v566
  %v568 = vpop.f32.mrb[0].mxu0
  %v569 = vadd.f32 %v337, %v568
  %v570 = vpop.f32.mrb[0].mxu0
  %v571 = vadd.f32 %v338, %v570
  %572 = vmatprep.mubr.bf16.mxu0 0
  %573 = vmatmul.mubr.bf16.gmra.mrb[0].mxu0 %v402
  %v574 = vpop.f32.mrb[0].mxu0
  %v575 = vadd.f32 %v339, %v574
  %v576 = vpop.f32.mrb[0].mxu0
  %v577 = vadd.f32 %v340, %v576
  %v578 = vpop.f32.mrb[0].mxu0
  %v579 = vadd.f32 %v341, %v578
  %v580 = vpop.f32.mrb[0].mxu0
  %v581 = vadd.f32 %v342, %v580
  %582 = vmatprep.mubr.bf16.mxu0 0
  %583 = vmatmul.mubr.bf16.gmra.mrb[0].mxu0 %v405
  %v584 = vpop.f32.mrb[0].mxu0
  %v585 = vadd.f32 %v343, %v584
  %v586 = vpop.f32.mrb[0].mxu0
  %v587 = vadd.f32 %v344, %v586
  %v588 = vpop.f32.mrb[0].mxu0
  %v589 = vadd.f32 %v345, %v588
  %v590 = vpop.f32.mrb[0].mxu0
  %v591 = vadd.f32 %v346, %v590
  %592 = vmatprep.mubr.bf16.mxu0 0
  %593 = vmatmul.mubr.bf16.gmra.mrb[0].mxu0 %v408
  %v594 = vpop.f32.mrb[0].mxu0
  %v595 = vadd.f32 %v347, %v594
  %v596 = vpop.f32.mrb[0].mxu0
  %v597 = vadd.f32 %v348, %v596
  %v598 = vpop.f32.mrb[0].mxu0
  %v599 = vadd.f32 %v349, %v598
  %v600 = vpop.f32.mrb[0].mxu0
  %v601 = vadd.f32 %v350, %v600
  %602 = vdwg.mxu0
  %v603 = vld [vmem:[%s4] sm:$0x3]
  %v605 = vlaneseq
  %v606 = vshrl.u32 %v605, 7
  %v607 = vsub.s32 0, %v606
  %v608 = vrot.slane %v603, %v607
  %v609 = vlaneseq
  %v610 = vshrl.u32 %v609, 7
  %v611 = vsub.s32 1, %v610
  %v612 = vrot.slane %v603, %v611
  %v615 = vadd.f32 %v445, %v608
  %v616 = vadd.f32 %v447, %v612
  %v617 = vadd.f32 %v449, %v608
  %v618 = vadd.f32 %v451, %v612
  %v619 = vadd.f32 %v455, %v608
  %v620 = vadd.f32 %v457, %v612
  %v621 = vadd.f32 %v459, %v608
  %v622 = vadd.f32 %v461, %v612
  %v623 = vadd.f32 %v465, %v608
  %v624 = vadd.f32 %v467, %v612
  %v625 = vadd.f32 %v469, %v608
  %v626 = vadd.f32 %v471, %v612
  %v627 = vadd.f32 %v475, %v608
  %v628 = vadd.f32 %v477, %v612
  %v629 = vadd.f32 %v479, %v608
  %v630 = vadd.f32 %v481, %v612
  %v631 = vadd.f32 %v485, %v608
  %v632 = vadd.f32 %v487, %v612
  %v633 = vadd.f32 %v489, %v608
  %v634 = vadd.f32 %v491, %v612
  %v635 = vadd.f32 %v495, %v608
  %v636 = vadd.f32 %v497, %v612
  %v637 = vadd.f32 %v499, %v608
  %v638 = vadd.f32 %v501, %v612
  %v639 = vadd.f32 %v505, %v608
  %v640 = vadd.f32 %v507, %v612
  %v641 = vadd.f32 %v509, %v608
  %v642 = vadd.f32 %v511, %v612
  %v643 = vadd.f32 %v515, %v608
  %v644 = vadd.f32 %v517, %v612
  %v645 = vadd.f32 %v519, %v608
  %v646 = vadd.f32 %v521, %v612
  %v647 = vadd.f32 %v525, %v608
  %v648 = vadd.f32 %v527, %v612
  %v649 = vadd.f32 %v529, %v608
  %v650 = vadd.f32 %v531, %v612
  %v651 = vadd.f32 %v535, %v608
  %v652 = vadd.f32 %v537, %v612
  %v653 = vadd.f32 %v539, %v608
  %v654 = vadd.f32 %v541, %v612
  %v655 = vadd.f32 %v545, %v608
  %v656 = vadd.f32 %v547, %v612
  %v657 = vadd.f32 %v549, %v608
  %v658 = vadd.f32 %v551, %v612
  %v659 = vadd.f32 %v555, %v608
  %v660 = vadd.f32 %v557, %v612
  %v661 = vadd.f32 %v559, %v608
  %v662 = vadd.f32 %v561, %v612
  %v663 = vadd.f32 %v565, %v608
  %v664 = vadd.f32 %v567, %v612
  %v665 = vadd.f32 %v569, %v608
  %v666 = vadd.f32 %v571, %v612
  %v667 = vadd.f32 %v575, %v608
  %v668 = vadd.f32 %v577, %v612
  %v669 = vadd.f32 %v579, %v608
  %v670 = vadd.f32 %v581, %v612
  %v671 = vadd.f32 %v585, %v608
  %v672 = vadd.f32 %v587, %v612
  %v673 = vadd.f32 %v589, %v608
  %v674 = vadd.f32 %v591, %v612
  %v675 = vadd.f32 %v595, %v608
  %v676 = vadd.f32 %v597, %v612
  %v677 = vadd.f32 %v599, %v608
  %v678 = vadd.f32 %v601, %v612
  %v679 = vmax.f32 %v615, 0.0
  %v680 = vmax.f32 %v616, 0.0
  %v681 = vmax.f32 %v617, 0.0
  %v682 = vmax.f32 %v618, 0.0
  %v683 = vmax.f32 %v619, 0.0
  %v684 = vmax.f32 %v620, 0.0
  %v685 = vmax.f32 %v621, 0.0
  %v686 = vmax.f32 %v622, 0.0
  %v687 = vmax.f32 %v623, 0.0
  %v688 = vmax.f32 %v624, 0.0
  %v689 = vmax.f32 %v625, 0.0
  %v690 = vmax.f32 %v626, 0.0
  %v691 = vmax.f32 %v627, 0.0
  %v692 = vmax.f32 %v628, 0.0
  %v693 = vmax.f32 %v629, 0.0
  %v694 = vmax.f32 %v630, 0.0
  %v695 = vmax.f32 %v631, 0.0
  %v696 = vmax.f32 %v632, 0.0
  %v697 = vmax.f32 %v633, 0.0
  %v698 = vmax.f32 %v634, 0.0
  %v699 = vmax.f32 %v635, 0.0
  %v700 = vmax.f32 %v636, 0.0
  %v701 = vmax.f32 %v637, 0.0
  %v702 = vmax.f32 %v638, 0.0
  %v703 = vmax.f32 %v639, 0.0
  %v704 = vmax.f32 %v640, 0.0
  %v705 = vmax.f32 %v641, 0.0
  %v706 = vmax.f32 %v642, 0.0
  %v707 = vmax.f32 %v643, 0.0
  %v708 = vmax.f32 %v644, 0.0
  %v709 = vmax.f32 %v645, 0.0
  %v710 = vmax.f32 %v646, 0.0
  %v711 = vmax.f32 %v647, 0.0
  %v712 = vmax.f32 %v648, 0.0
  %v713 = vmax.f32 %v649, 0.0
  %v714 = vmax.f32 %v650, 0.0
  %v715 = vmax.f32 %v651, 0.0
  %v716 = vmax.f32 %v652, 0.0
  %v717 = vmax.f32 %v653, 0.0
  %v718 = vmax.f32 %v654, 0.0
  %v719 = vmax.f32 %v655, 0.0
  %v720 = vmax.f32 %v656, 0.0
  %v721 = vmax.f32 %v657, 0.0
  %v722 = vmax.f32 %v658, 0.0
  %v723 = vmax.f32 %v659, 0.0
  %v724 = vmax.f32 %v660, 0.0
  %v725 = vmax.f32 %v661, 0.0
  %v726 = vmax.f32 %v662, 0.0
  %v727 = vmax.f32 %v663, 0.0
  %v728 = vmax.f32 %v664, 0.0
  %v729 = vmax.f32 %v665, 0.0
  %v730 = vmax.f32 %v666, 0.0
  %v731 = vmax.f32 %v667, 0.0
  %v732 = vmax.f32 %v668, 0.0
  %v733 = vmax.f32 %v669, 0.0
  %v734 = vmax.f32 %v670, 0.0
  %v735 = vmax.f32 %v671, 0.0
  %v736 = vmax.f32 %v672, 0.0
  %v737 = vmax.f32 %v673, 0.0
  %v738 = vmax.f32 %v674, 0.0
  %v739 = vmax.f32 %v675, 0.0
  %v740 = vmax.f32 %v676, 0.0
  %v741 = vmax.f32 %v677, 0.0
  %v742 = vmax.f32 %v678, 0.0
  %v743 = vpack.c.bf16 %v681, %v679
  %v744 = vpack.c.bf16 %v682, %v680
  %v745 = vpack.c.bf16 %v685, %v683
  %v746 = vpack.c.bf16 %v686, %v684
  %v747 = vpack.c.bf16 %v689, %v687
  %v748 = vpack.c.bf16 %v690, %v688
  %v749 = vpack.c.bf16 %v693, %v691
  %v750 = vpack.c.bf16 %v694, %v692
  %v751 = vpack.c.bf16 %v697, %v695
  %v752 = vpack.c.bf16 %v698, %v696
  %v753 = vpack.c.bf16 %v701, %v699
  %v754 = vpack.c.bf16 %v702, %v700
  %v755 = vpack.c.bf16 %v705, %v703
  %v756 = vpack.c.bf16 %v706, %v704
  %v757 = vpack.c.bf16 %v709, %v707
  %v758 = vpack.c.bf16 %v710, %v708
  %v759 = vpack.c.bf16 %v713, %v711
  %v760 = vpack.c.bf16 %v714, %v712
  %v761 = vpack.c.bf16 %v717, %v715
  %v762 = vpack.c.bf16 %v718, %v716
  %v763 = vpack.c.bf16 %v721, %v719
  %v764 = vpack.c.bf16 %v722, %v720
  %v765 = vpack.c.bf16 %v725, %v723
  %v766 = vpack.c.bf16 %v726, %v724
  %v767 = vpack.c.bf16 %v729, %v727
  %v768 = vpack.c.bf16 %v730, %v728
  %v769 = vpack.c.bf16 %v733, %v731
  %v770 = vpack.c.bf16 %v734, %v732
  %v771 = vpack.c.bf16 %v737, %v735
  %v772 = vpack.c.bf16 %v738, %v736
  %v773 = vpack.c.bf16 %v741, %v739
  %v774 = vpack.c.bf16 %v742, %v740
  %v775 = vld [vmem:[%s5] sm:$0xff]
  %v776 = vld [vmem:[%s5 + $0x8] sm:$0xff]
  %v777 = vld [vmem:[%s5 + $0x10] sm:$0xff]
  %v778 = vld [vmem:[%s5 + $0x18] sm:$0xff]
  %v779 = vld [vmem:[%s5 + $0x20] sm:$0xff]
  %v780 = vld [vmem:[%s5 + $0x28] sm:$0xff]
  %v781 = vld [vmem:[%s5 + $0x30] sm:$0xff]
  %v782 = vld [vmem:[%s5 + $0x38] sm:$0xff]
  %v783 = vld [vmem:[%s5 + $0x40] sm:$0xff]
  %v784 = vld [vmem:[%s5 + $0x48] sm:$0xff]
  %v785 = vld [vmem:[%s5 + $0x50] sm:$0xff]
  %v786 = vld [vmem:[%s5 + $0x58] sm:$0xff]
  %v787 = vld [vmem:[%s5 + $0x60] sm:$0xff]
  %v788 = vld [vmem:[%s5 + $0x68] sm:$0xff]
  %v789 = vld [vmem:[%s5 + $0x70] sm:$0xff]
  %v790 = vld [vmem:[%s5 + $0x78] sm:$0xff]
  %v791 = vld [vmem:[%s5 + $0x80] sm:$0xff]
  %v792 = vld [vmem:[%s5 + $0x88] sm:$0xff]
  %v793 = vld [vmem:[%s5 + $0x90] sm:$0xff]
  %v794 = vld [vmem:[%s5 + $0x98] sm:$0xff]
  %v795 = vld [vmem:[%s5 + $0xa0] sm:$0xff]
  %v796 = vld [vmem:[%s5 + $0xa8] sm:$0xff]
  %v797 = vld [vmem:[%s5 + $0xb0] sm:$0xff]
  %v798 = vld [vmem:[%s5 + $0xb8] sm:$0xff]
  %v799 = vld [vmem:[%s5 + $0xc0] sm:$0xff]
  %v800 = vld [vmem:[%s5 + $0xc8] sm:$0xff]
  %v801 = vld [vmem:[%s5 + $0xd0] sm:$0xff]
  %v802 = vld [vmem:[%s5 + $0xd8] sm:$0xff]
  %v803 = vld [vmem:[%s5 + $0xe0] sm:$0xff]
  %v804 = vld [vmem:[%s5 + $0xe8] sm:$0xff]
  %v805 = vld [vmem:[%s5 + $0xf0] sm:$0xff]
  %v806 = vld [vmem:[%s5 + $0xf8] sm:$0xff]
  %v807 = vld [vmem:[%s6] sm:$0x3]
  %v809 = vlaneseq
  %v810 = vshrl.u32 %v809, 7
  %v811 = vsub.s32 0, %v810
  %v812 = vrot.slane %v807, %v811
  %v813 = vlaneseq
  %v814 = vshrl.u32 %v813, 7
  %v815 = vsub.s32 1, %v814
  %v816 = vrot.slane %v807, %v815
  %v851 = vunpack.c.l.b16 %v775
  %v852 = vunpack.c.h.b16 %v775
  %v853 = vunpack.c.l.b16 %v776
  %v854 = vunpack.c.h.b16 %v776
  %v855 = vunpack.c.l.b16 %v777
  %v856 = vunpack.c.h.b16 %v777
  %v857 = vunpack.c.l.b16 %v778
  %v858 = vunpack.c.h.b16 %v778
  %v859 = vunpack.c.l.b16 %v779
  %v860 = vunpack.c.h.b16 %v779
  %v861 = vunpack.c.l.b16 %v780
  %v862 = vunpack.c.h.b16 %v780
  %v863 = vunpack.c.l.b16 %v781
  %v864 = vunpack.c.h.b16 %v781
  %v865 = vunpack.c.l.b16 %v782
  %v866 = vunpack.c.h.b16 %v782
  %v867 = vunpack.c.l.b16 %v783
  %v868 = vunpack.c.h.b16 %v783
  %v869 = vunpack.c.l.b16 %v784
  %v870 = vunpack.c.h.b16 %v784
  %v871 = vunpack.c.l.b16 %v785
  %v872 = vunpack.c.h.b16 %v785
  %v873 = vunpack.c.l.b16 %v786
  %v874 = vunpack.c.h.b16 %v786
  %v875 = vunpack.c.l.b16 %v787
  %v876 = vunpack.c.h.b16 %v787
  %v877 = vunpack.c.l.b16 %v788
  %v878 = vunpack.c.h.b16 %v788
  %v879 = vunpack.c.l.b16 %v789
  %v880 = vunpack.c.h.b16 %v789
  %v881 = vunpack.c.l.b16 %v790
  %v882 = vunpack.c.h.b16 %v790
  %v883 = vunpack.c.l.b16 %v791
  %v884 = vunpack.c.h.b16 %v791
  %v885 = vunpack.c.l.b16 %v792
  %v886 = vunpack.c.h.b16 %v792
  %v887 = vunpack.c.l.b16 %v793
  %v888 = vunpack.c.h.b16 %v793
  %v889 = vunpack.c.l.b16 %v794
  %v890 = vunpack.c.h.b16 %v794
  %v891 = vunpack.c.l.b16 %v795
  %v892 = vunpack.c.h.b16 %v795
  %v893 = vunpack.c.l.b16 %v796
  %v894 = vunpack.c.h.b16 %v796
  %v895 = vunpack.c.l.b16 %v797
  %v896 = vunpack.c.h.b16 %v797
  %v897 = vunpack.c.l.b16 %v798
  %v898 = vunpack.c.h.b16 %v798
  %v899 = vunpack.c.l.b16 %v799
  %v900 = vunpack.c.h.b16 %v799
  %v901 = vunpack.c.l.b16 %v800
  %v902 = vunpack.c.h.b16 %v800
  %v903 = vunpack.c.l.b16 %v801
  %v904 = vunpack.c.h.b16 %v801
  %v905 = vunpack.c.l.b16 %v802
  %v906 = vunpack.c.h.b16 %v802
  %v907 = vunpack.c.l.b16 %v803
  %v908 = vunpack.c.h.b16 %v803
  %v909 = vunpack.c.l.b16 %v804
  %v910 = vunpack.c.h.b16 %v804
  %v911 = vunpack.c.l.b16 %v805
  %v912 = vunpack.c.h.b16 %v805
  %v913 = vunpack.c.l.b16 %v806
  %v914 = vunpack.c.h.b16 %v806
  %v915 = vpack.c.b16 %v853, %v851
  %v916 = vpack.c.b16 %v854, %v852
  %v917 = vpack.c.b16 %v857, %v855
  %v918 = vpack.c.b16 %v858, %v856
  %v919 = vpack.c.b16 %v861, %v859
  %v920 = vpack.c.b16 %v862, %v860
  %v921 = vpack.c.b16 %v865, %v863
  %v922 = vpack.c.b16 %v866, %v864
  %v923 = vpack.c.b16 %v869, %v867
  %v924 = vpack.c.b16 %v870, %v868
  %v925 = vpack.c.b16 %v873, %v871
  %v926 = vpack.c.b16 %v874, %v872
  %v927 = vpack.c.b16 %v877, %v875
  %v928 = vpack.c.b16 %v878, %v876
  %v929 = vpack.c.b16 %v881, %v879
  %v930 = vpack.c.b16 %v882, %v880
  %v931 = vpack.c.b16 %v885, %v883
  %v932 = vpack.c.b16 %v886, %v884
  %v933 = vpack.c.b16 %v889, %v887
  %v934 = vpack.c.b16 %v890, %v888
  %v935 = vpack.c.b16 %v893, %v891
  %v936 = vpack.c.b16 %v894, %v892
  %v937 = vpack.c.b16 %v897, %v895
  %v938 = vpack.c.b16 %v898, %v896
  %v939 = vpack.c.b16 %v901, %v899
  %v940 = vpack.c.b16 %v902, %v900
  %v941 = vpack.c.b16 %v905, %v903
  %v942 = vpack.c.b16 %v906, %v904
  %v943 = vpack.c.b16 %v909, %v907
  %v944 = vpack.c.b16 %v910, %v908
  %v945 = vpack.c.b16 %v913, %v911
  %v946 = vpack.c.b16 %v914, %v912
  %979 = vmatprep.subr.bf16.mxu0 %v916
  %980 = vmatpush1.bf16.msra.mxu0 %v915
  %981 = vmatprep.subr.bf16.mxu0 %v918
  %982 = vmatpush1.bf16.msra.mxu0 %v917
  %983 = vmatprep.subr.bf16.mxu0 %v920
  %984 = vmatpush1.bf16.msra.mxu0 %v919
  %985 = vmatprep.subr.bf16.mxu0 %v922
  %986 = vmatpush1.bf16.msra.mxu0 %v921
  %987 = vmatprep.subr.bf16.mxu0 %v924
  %988 = vmatpush1.bf16.msra.mxu0 %v923
  %989 = vmatprep.subr.bf16.mxu0 %v926
  %990 = vmatpush1.bf16.msra.mxu0 %v925
  %991 = vmatprep.subr.bf16.mxu0 %v928
  %992 = vmatpush1.bf16.msra.mxu0 %v927
  %993 = vmatprep.subr.bf16.mxu0 %v930
  %994 = vmatpush1.bf16.msra.mxu0 %v929
  %995 = vmatprep.subr.bf16.mxu0 %v932
  %996 = vmatpush1.bf16.msra.mxu0 %v931
  %997 = vmatprep.subr.bf16.mxu0 %v934
  %998 = vmatpush1.bf16.msra.mxu0 %v933
  %999 = vmatprep.subr.bf16.mxu0 %v936
  %1000 = vmatpush1.bf16.msra.mxu0 %v935
  %1001 = vmatprep.subr.bf16.mxu0 %v938
  %1002 = vmatpush1.bf16.msra.mxu0 %v937
  %1003 = vmatprep.subr.bf16.mxu0 %v940
  %1004 = vmatpush1.bf16.msra.mxu0 %v939
  %1005 = vmatprep.subr.bf16.mxu0 %v942
  %1006 = vmatpush1.bf16.msra.mxu0 %v941
  %1007 = vmatprep.subr.bf16.mxu0 %v944
  %1008 = vmatpush1.bf16.msra.mxu0 %v943
  %1009 = vmatprep.subr.bf16.mxu0 %v946
  %1010 = vmatpush1.bf16.msra.mxu0 %v945
  %1011 = vmatprep.mubr.bf16.mxu0 %v744
  %1012 = vmatmul.mubr.bf16.gmra.mrb[0].mxu0 %v743
  %v1013 = vpop.f32.mrb[0].mxu0
  %v1014 = vadd.f32 %v812, %v1013
  %v1015 = vpop.f32.mrb[0].mxu0
  %v1016 = vadd.f32 %v816, %v1015
  %v1017 = vpop.f32.mrb[0].mxu0
  %v1018 = vadd.f32 %v812, %v1017
  %v1019 = vpop.f32.mrb[0].mxu0
  %v1020 = vadd.f32 %v816, %v1019
  %1021 = vmatprep.mubr.bf16.mxu0 %v746
  %1022 = vmatmul.mubr.bf16.gmra.mrb[0].mxu0 %v745
  %v1023 = vpop.f32.mrb[0].mxu0
  %v1024 = vadd.f32 %v812, %v1023
  %v1025 = vpop.f32.mrb[0].mxu0
  %v1026 = vadd.f32 %v816, %v1025
  %v1027 = vpop.f32.mrb[0].mxu0
  %v1028 = vadd.f32 %v812, %v1027
  %v1029 = vpop.f32.mrb[0].mxu0
  %v1030 = vadd.f32 %v816, %v1029
  %1031 = vmatprep.mubr.bf16.mxu0 %v748
  %1032 = vmatmul.mubr.bf16.gmra.mrb[0].mxu0 %v747
  %v1033 = vpop.f32.mrb[0].mxu0
  %v1034 = vadd.f32 %v812, %v1033
  %v1035 = vpop.f32.mrb[0].mxu0
  %v1036 = vadd.f32 %v816, %v1035
  %v1037 = vpop.f32.mrb[0].mxu0
  %v1038 = vadd.f32 %v812, %v1037
  %v1039 = vpop.f32.mrb[0].mxu0
  %v1040 = vadd.f32 %v816, %v1039
  %1041 = vmatprep.mubr.bf16.mxu0 %v750
  %1042 = vmatmul.mubr.bf16.gmra.mrb[0].mxu0 %v749
  %v1043 = vpop.f32.mrb[0].mxu0
  %v1044 = vadd.f32 %v812, %v1043
  %v1045 = vpop.f32.mrb[0].mxu0
  %v1046 = vadd.f32 %v816, %v1045
  %v1047 = vpop.f32.mrb[0].mxu0
  %v1048 = vadd.f32 %v812, %v1047
  %v1049 = vpop.f32.mrb[0].mxu0
  %v1050 = vadd.f32 %v816, %v1049
  %1051 = vmatprep.mubr.bf16.mxu0 %v752
  %1052 = vmatmul.mubr.bf16.gmra.mrb[0].mxu0 %v751
  %v1053 = vpop.f32.mrb[0].mxu0
  %v1054 = vadd.f32 %v812, %v1053
  %v1055 = vpop.f32.mrb[0].mxu0
  %v1056 = vadd.f32 %v816, %v1055
  %v1057 = vpop.f32.mrb[0].mxu0
  %v1058 = vadd.f32 %v812, %v1057
  %v1059 = vpop.f32.mrb[0].mxu0
  %v1060 = vadd.f32 %v816, %v1059
  %1061 = vmatprep.mubr.bf16.mxu0 %v754
  %1062 = vmatmul.mubr.bf16.gmra.mrb[0].mxu0 %v753
  %v1063 = vpop.f32.mrb[0].mxu0
  %v1064 = vadd.f32 %v812, %v1063
  %v1065 = vpop.f32.mrb[0].mxu0
  %v1066 = vadd.f32 %v816, %v1065
  %v1067 = vpop.f32.mrb[0].mxu0
  %v1068 = vadd.f32 %v812, %v1067
  %v1069 = vpop.f32.mrb[0].mxu0
  %v1070 = vadd.f32 %v816, %v1069
  %1071 = vmatprep.mubr.bf16.mxu0 %v756
  %1072 = vmatmul.mubr.bf16.gmra.mrb[0].mxu0 %v755
  %v1073 = vpop.f32.mrb[0].mxu0
  %v1074 = vadd.f32 %v812, %v1073
  %v1075 = vpop.f32.mrb[0].mxu0
  %v1076 = vadd.f32 %v816, %v1075
  %v1077 = vpop.f32.mrb[0].mxu0
  %v1078 = vadd.f32 %v812, %v1077
  %v1079 = vpop.f32.mrb[0].mxu0
  %v1080 = vadd.f32 %v816, %v1079
  %1081 = vmatprep.mubr.bf16.mxu0 %v758
  %1082 = vmatmul.mubr.bf16.gmra.mrb[0].mxu0 %v757
  %v1083 = vpop.f32.mrb[0].mxu0
  %v1084 = vadd.f32 %v812, %v1083
  %v1085 = vpop.f32.mrb[0].mxu0
  %v1086 = vadd.f32 %v816, %v1085
  %v1087 = vpop.f32.mrb[0].mxu0
  %v1088 = vadd.f32 %v812, %v1087
  %v1089 = vpop.f32.mrb[0].mxu0
  %v1090 = vadd.f32 %v816, %v1089
  %1091 = vmatprep.mubr.bf16.mxu0 %v760
  %1092 = vmatmul.mubr.bf16.gmra.mrb[0].mxu0 %v759
  %v1093 = vpop.f32.mrb[0].mxu0
  %v1094 = vadd.f32 %v812, %v1093
  %v1095 = vpop.f32.mrb[0].mxu0
  %v1096 = vadd.f32 %v816, %v1095
  %v1097 = vpop.f32.mrb[0].mxu0
  %v1098 = vadd.f32 %v812, %v1097
  %v1099 = vpop.f32.mrb[0].mxu0
  %v1100 = vadd.f32 %v816, %v1099
  %1101 = vmatprep.mubr.bf16.mxu0 %v762
  %1102 = vmatmul.mubr.bf16.gmra.mrb[0].mxu0 %v761
  %v1103 = vpop.f32.mrb[0].mxu0
  %v1104 = vadd.f32 %v812, %v1103
  %v1105 = vpop.f32.mrb[0].mxu0
  %v1106 = vadd.f32 %v816, %v1105
  %v1107 = vpop.f32.mrb[0].mxu0
  %v1108 = vadd.f32 %v812, %v1107
  %v1109 = vpop.f32.mrb[0].mxu0
  %v1110 = vadd.f32 %v816, %v1109
  %1111 = vmatprep.mubr.bf16.mxu0 %v764
  %1112 = vmatmul.mubr.bf16.gmra.mrb[0].mxu0 %v763
  %v1113 = vpop.f32.mrb[0].mxu0
  %v1114 = vadd.f32 %v812, %v1113
  %v1115 = vpop.f32.mrb[0].mxu0
  %v1116 = vadd.f32 %v816, %v1115
  %v1117 = vpop.f32.mrb[0].mxu0
  %v1118 = vadd.f32 %v812, %v1117
  %v1119 = vpop.f32.mrb[0].mxu0
  %v1120 = vadd.f32 %v816, %v1119
  %1121 = vmatprep.mubr.bf16.mxu0 %v766
  %1122 = vmatmul.mubr.bf16.gmra.mrb[0].mxu0 %v765
  %v1123 = vpop.f32.mrb[0].mxu0
  %v1124 = vadd.f32 %v812, %v1123
  %v1125 = vpop.f32.mrb[0].mxu0
  %v1126 = vadd.f32 %v816, %v1125
  %v1127 = vpop.f32.mrb[0].mxu0
  %v1128 = vadd.f32 %v812, %v1127
  %v1129 = vpop.f32.mrb[0].mxu0
  %v1130 = vadd.f32 %v816, %v1129
  %1131 = vmatprep.mubr.bf16.mxu0 %v768
  %1132 = vmatmul.mubr.bf16.gmra.mrb[0].mxu0 %v767
  %v1133 = vpop.f32.mrb[0].mxu0
  %v1134 = vadd.f32 %v812, %v1133
  %v1135 = vpop.f32.mrb[0].mxu0
  %v1136 = vadd.f32 %v816, %v1135
  %v1137 = vpop.f32.mrb[0].mxu0
  %v1138 = vadd.f32 %v812, %v1137
  %v1139 = vpop.f32.mrb[0].mxu0
  %v1140 = vadd.f32 %v816, %v1139
  %1141 = vmatprep.mubr.bf16.mxu0 %v770
  %1142 = vmatmul.mubr.bf16.gmra.mrb[0].mxu0 %v769
  %v1143 = vpop.f32.mrb[0].mxu0
  %v1144 = vadd.f32 %v812, %v1143
  %v1145 = vpop.f32.mrb[0].mxu0
  %v1146 = vadd.f32 %v816, %v1145
  %v1147 = vpop.f32.mrb[0].mxu0
  %v1148 = vadd.f32 %v812, %v1147
  %v1149 = vpop.f32.mrb[0].mxu0
  %v1150 = vadd.f32 %v816, %v1149
  %1151 = vmatprep.mubr.bf16.mxu0 %v772
  %1152 = vmatmul.mubr.bf16.gmra.mrb[0].mxu0 %v771
  %v1153 = vpop.f32.mrb[0].mxu0
  %v1154 = vadd.f32 %v812, %v1153
  %v1155 = vpop.f32.mrb[0].mxu0
  %v1156 = vadd.f32 %v816, %v1155
  %v1157 = vpop.f32.mrb[0].mxu0
  %v1158 = vadd.f32 %v812, %v1157
  %v1159 = vpop.f32.mrb[0].mxu0
  %v1160 = vadd.f32 %v816, %v1159
  %1161 = vmatprep.mubr.bf16.mxu0 %v774
  %1162 = vmatmul.mubr.bf16.gmra.mrb[0].mxu0 %v773
  %v1163 = vpop.f32.mrb[0].mxu0
  %v1164 = vadd.f32 %v812, %v1163
  %v1165 = vpop.f32.mrb[0].mxu0
  %v1166 = vadd.f32 %v816, %v1165
  %v1167 = vpop.f32.mrb[0].mxu0
  %v1168 = vadd.f32 %v812, %v1167
  %v1169 = vpop.f32.mrb[0].mxu0
  %v1170 = vadd.f32 %v816, %v1169
  %1171 = vdwg.mxu0
  %v1172 = vmax.f32 %v1014, 0.0
  %v1173 = vmax.f32 %v1016, 0.0
  %v1174 = vmax.f32 %v1018, 0.0
  %v1175 = vmax.f32 %v1020, 0.0
  %v1176 = vmax.f32 %v1024, 0.0
  %v1177 = vmax.f32 %v1026, 0.0
  %v1178 = vmax.f32 %v1028, 0.0
  %v1179 = vmax.f32 %v1030, 0.0
  %v1180 = vmax.f32 %v1034, 0.0
  %v1181 = vmax.f32 %v1036, 0.0
  %v1182 = vmax.f32 %v1038, 0.0
  %v1183 = vmax.f32 %v1040, 0.0
  %v1184 = vmax.f32 %v1044, 0.0
  %v1185 = vmax.f32 %v1046, 0.0
  %v1186 = vmax.f32 %v1048, 0.0
  %v1187 = vmax.f32 %v1050, 0.0
  %v1188 = vmax.f32 %v1054, 0.0
  %v1189 = vmax.f32 %v1056, 0.0
  %v1190 = vmax.f32 %v1058, 0.0
  %v1191 = vmax.f32 %v1060, 0.0
  %v1192 = vmax.f32 %v1064, 0.0
  %v1193 = vmax.f32 %v1066, 0.0
  %v1194 = vmax.f32 %v1068, 0.0
  %v1195 = vmax.f32 %v1070, 0.0
  %v1196 = vmax.f32 %v1074, 0.0
  %v1197 = vmax.f32 %v1076, 0.0
  %v1198 = vmax.f32 %v1078, 0.0
  %v1199 = vmax.f32 %v1080, 0.0
  %v1200 = vmax.f32 %v1084, 0.0
  %v1201 = vmax.f32 %v1086, 0.0
  %v1202 = vmax.f32 %v1088, 0.0
  %v1203 = vmax.f32 %v1090, 0.0
  %v1204 = vmax.f32 %v1094, 0.0
  %v1205 = vmax.f32 %v1096, 0.0
  %v1206 = vmax.f32 %v1098, 0.0
  %v1207 = vmax.f32 %v1100, 0.0
  %v1208 = vmax.f32 %v1104, 0.0
  %v1209 = vmax.f32 %v1106, 0.0
  %v1210 = vmax.f32 %v1108, 0.0
  %v1211 = vmax.f32 %v1110, 0.0
  %v1212 = vmax.f32 %v1114, 0.0
  %v1213 = vmax.f32 %v1116, 0.0
  %v1214 = vmax.f32 %v1118, 0.0
  %v1215 = vmax.f32 %v1120, 0.0
  %v1216 = vmax.f32 %v1124, 0.0
  %v1217 = vmax.f32 %v1126, 0.0
  %v1218 = vmax.f32 %v1128, 0.0
  %v1219 = vmax.f32 %v1130, 0.0
  %v1220 = vmax.f32 %v1134, 0.0
  %v1221 = vmax.f32 %v1136, 0.0
  %v1222 = vmax.f32 %v1138, 0.0
  %v1223 = vmax.f32 %v1140, 0.0
  %v1224 = vmax.f32 %v1144, 0.0
  %v1225 = vmax.f32 %v1146, 0.0
  %v1226 = vmax.f32 %v1148, 0.0
  %v1227 = vmax.f32 %v1150, 0.0
  %v1228 = vmax.f32 %v1154, 0.0
  %v1229 = vmax.f32 %v1156, 0.0
  %v1230 = vmax.f32 %v1158, 0.0
  %v1231 = vmax.f32 %v1160, 0.0
  %v1232 = vmax.f32 %v1164, 0.0
  %v1233 = vmax.f32 %v1166, 0.0
  %v1234 = vmax.f32 %v1168, 0.0
  %v1235 = vmax.f32 %v1170, 0.0
  %v1236 = vpack.c.bf16 %v1174, %v1172
  %v1237 = vpack.c.bf16 %v1175, %v1173
  %v1238 = vpack.c.bf16 %v1178, %v1176
  %v1239 = vpack.c.bf16 %v1179, %v1177
  %v1240 = vpack.c.bf16 %v1182, %v1180
  %v1241 = vpack.c.bf16 %v1183, %v1181
  %v1242 = vpack.c.bf16 %v1186, %v1184
  %v1243 = vpack.c.bf16 %v1187, %v1185
  %v1244 = vpack.c.bf16 %v1190, %v1188
  %v1245 = vpack.c.bf16 %v1191, %v1189
  %v1246 = vpack.c.bf16 %v1194, %v1192
  %v1247 = vpack.c.bf16 %v1195, %v1193
  %v1248 = vpack.c.bf16 %v1198, %v1196
  %v1249 = vpack.c.bf16 %v1199, %v1197
  %v1250 = vpack.c.bf16 %v1202, %v1200
  %v1251 = vpack.c.bf16 %v1203, %v1201
  %v1252 = vpack.c.bf16 %v1206, %v1204
  %v1253 = vpack.c.bf16 %v1207, %v1205
  %v1254 = vpack.c.bf16 %v1210, %v1208
  %v1255 = vpack.c.bf16 %v1211, %v1209
  %v1256 = vpack.c.bf16 %v1214, %v1212
  %v1257 = vpack.c.bf16 %v1215, %v1213
  %v1258 = vpack.c.bf16 %v1218, %v1216
  %v1259 = vpack.c.bf16 %v1219, %v1217
  %v1260 = vpack.c.bf16 %v1222, %v1220
  %v1261 = vpack.c.bf16 %v1223, %v1221
  %v1262 = vpack.c.bf16 %v1226, %v1224
  %v1263 = vpack.c.bf16 %v1227, %v1225
  %v1264 = vpack.c.bf16 %v1230, %v1228
  %v1265 = vpack.c.bf16 %v1231, %v1229
  %v1266 = vpack.c.bf16 %v1234, %v1232
  %v1267 = vpack.c.bf16 %v1235, %v1233
  %v1268 = vld [vmem:[%s7] sm:$0xf]
  %v1269 = vld [vmem:[%s7 + $0x4] sm:$0xf]
  %v1270 = vld [vmem:[%s7 + $0x8] sm:$0xf]
  %v1271 = vld [vmem:[%s7 + $0xc] sm:$0xf]
  %v1272 = vld [vmem:[%s7 + $0x10] sm:$0xf]
  %v1273 = vld [vmem:[%s7 + $0x14] sm:$0xf]
  %v1274 = vld [vmem:[%s7 + $0x18] sm:$0xf]
  %v1275 = vld [vmem:[%s7 + $0x1c] sm:$0xf]
  %v1276 = vld [vmem:[%s7 + $0x20] sm:$0xf]
  %v1277 = vld [vmem:[%s7 + $0x24] sm:$0xf]
  %v1278 = vld [vmem:[%s7 + $0x28] sm:$0xf]
  %v1279 = vld [vmem:[%s7 + $0x2c] sm:$0xf]
  %v1280 = vld [vmem:[%s7 + $0x30] sm:$0xf]
  %v1281 = vld [vmem:[%s7 + $0x34] sm:$0xf]
  %v1282 = vld [vmem:[%s7 + $0x38] sm:$0xf]
  %v1283 = vld [vmem:[%s7 + $0x3c] sm:$0xf]
  %v1284 = vld [vmem:[%s7 + $0x40] sm:$0xf]
  %v1285 = vld [vmem:[%s7 + $0x44] sm:$0xf]
  %v1286 = vld [vmem:[%s7 + $0x48] sm:$0xf]
  %v1287 = vld [vmem:[%s7 + $0x4c] sm:$0xf]
  %v1288 = vld [vmem:[%s7 + $0x50] sm:$0xf]
  %v1289 = vld [vmem:[%s7 + $0x54] sm:$0xf]
  %v1290 = vld [vmem:[%s7 + $0x58] sm:$0xf]
  %v1291 = vld [vmem:[%s7 + $0x5c] sm:$0xf]
  %v1292 = vld [vmem:[%s7 + $0x60] sm:$0xf]
  %v1293 = vld [vmem:[%s7 + $0x64] sm:$0xf]
  %v1294 = vld [vmem:[%s7 + $0x68] sm:$0xf]
  %v1295 = vld [vmem:[%s7 + $0x6c] sm:$0xf]
  %v1296 = vld [vmem:[%s7 + $0x70] sm:$0xf]
  %v1297 = vld [vmem:[%s7 + $0x74] sm:$0xf]
  %v1298 = vld [vmem:[%s7 + $0x78] sm:$0xf]
  %v1299 = vld [vmem:[%s7 + $0x7c] sm:$0xf]
  %v1300 = vld [vmem:[%s8] sm:$0x1]
  %v1302 = vlaneseq
  %v1303 = vshrl.u32 %v1302, 7
  %v1304 = vsub.s32 0, %v1303
  %v1305 = vrot.slane %v1300, %v1304
  %v1339 = vunpack.c.l.b16 %v1268
  %v1340 = vunpack.c.l.b16 %v1269
  %v1341 = vunpack.c.l.b16 %v1270
  %v1342 = vunpack.c.l.b16 %v1271
  %v1343 = vunpack.c.l.b16 %v1272
  %v1344 = vunpack.c.l.b16 %v1273
  %v1345 = vunpack.c.l.b16 %v1274
  %v1346 = vunpack.c.l.b16 %v1275
  %v1347 = vunpack.c.l.b16 %v1276
  %v1348 = vunpack.c.l.b16 %v1277
  %v1349 = vunpack.c.l.b16 %v1278
  %v1350 = vunpack.c.l.b16 %v1279
  %v1351 = vunpack.c.l.b16 %v1280
  %v1352 = vunpack.c.l.b16 %v1281
  %v1353 = vunpack.c.l.b16 %v1282
  %v1354 = vunpack.c.l.b16 %v1283
  %v1355 = vunpack.c.l.b16 %v1284
  %v1356 = vunpack.c.l.b16 %v1285
  %v1357 = vunpack.c.l.b16 %v1286
  %v1358 = vunpack.c.l.b16 %v1287
  %v1359 = vunpack.c.l.b16 %v1288
  %v1360 = vunpack.c.l.b16 %v1289
  %v1361 = vunpack.c.l.b16 %v1290
  %v1362 = vunpack.c.l.b16 %v1291
  %v1363 = vunpack.c.l.b16 %v1292
  %v1364 = vunpack.c.l.b16 %v1293
  %v1365 = vunpack.c.l.b16 %v1294
  %v1366 = vunpack.c.l.b16 %v1295
  %v1367 = vunpack.c.l.b16 %v1296
  %v1368 = vunpack.c.l.b16 %v1297
  %v1369 = vunpack.c.l.b16 %v1298
  %v1370 = vunpack.c.l.b16 %v1299
  %v1371 = vpack.c.b16 %v1340, %v1339
  %v1372 = vpack.c.b16 %v1342, %v1341
  %v1373 = vpack.c.b16 %v1344, %v1343
  %v1374 = vpack.c.b16 %v1346, %v1345
  %v1375 = vpack.c.b16 %v1348, %v1347
  %v1376 = vpack.c.b16 %v1350, %v1349
  %v1377 = vpack.c.b16 %v1352, %v1351
  %v1378 = vpack.c.b16 %v1354, %v1353
  %v1379 = vpack.c.b16 %v1356, %v1355
  %v1380 = vpack.c.b16 %v1358, %v1357
  %v1381 = vpack.c.b16 %v1360, %v1359
  %v1382 = vpack.c.b16 %v1362, %v1361
  %v1383 = vpack.c.b16 %v1364, %v1363
  %v1384 = vpack.c.b16 %v1366, %v1365
  %v1385 = vpack.c.b16 %v1368, %v1367
  %v1386 = vpack.c.b16 %v1370, %v1369
  %1403 = vmatprep.subr.bf16.mxu0 0
  %1404 = vmatpush1.bf16.msra.mxu0 %v1371
  %1405 = vmatprep.subr.bf16.mxu0 0
  %1406 = vmatpush1.bf16.msra.mxu0 %v1372
  %1407 = vmatprep.subr.bf16.mxu0 0
  %1408 = vmatpush1.bf16.msra.mxu0 %v1373
  %1409 = vmatprep.subr.bf16.mxu0 0
  %1410 = vmatpush1.bf16.msra.mxu0 %v1374
  %1411 = vmatprep.subr.bf16.mxu0 0
  %1412 = vmatpush1.bf16.msra.mxu0 %v1375
  %1413 = vmatprep.subr.bf16.mxu0 0
  %1414 = vmatpush1.bf16.msra.mxu0 %v1376
  %1415 = vmatprep.subr.bf16.mxu0 0
  %1416 = vmatpush1.bf16.msra.mxu0 %v1377
  %1417 = vmatprep.subr.bf16.mxu0 0
  %1418 = vmatpush1.bf16.msra.mxu0 %v1378
  %1419 = vmatprep.subr.bf16.mxu0 0
  %1420 = vmatpush1.bf16.msra.mxu0 %v1379
  %1421 = vmatprep.subr.bf16.mxu0 0
  %1422 = vmatpush1.bf16.msra.mxu0 %v1380
  %1423 = vmatprep.subr.bf16.mxu0 0
  %1424 = vmatpush1.bf16.msra.mxu0 %v1381
  %1425 = vmatprep.subr.bf16.mxu0 0
  %1426 = vmatpush1.bf16.msra.mxu0 %v1382
  %1427 = vmatprep.subr.bf16.mxu0 0
  %1428 = vmatpush1.bf16.msra.mxu0 %v1383
  %1429 = vmatprep.subr.bf16.mxu0 0
  %1430 = vmatpush1.bf16.msra.mxu0 %v1384
  %1431 = vmatprep.subr.bf16.mxu0 0
  %1432 = vmatpush1.bf16.msra.mxu0 %v1385
  %1433 = vmatprep.subr.bf16.mxu0 0
  %1434 = vmatpush1.bf16.msra.mxu0 %v1386
  %1435 = vmatprep.mubr.bf16.mxu0 %v1237
  %1436 = vmatmul.mubr.bf16.gmra.mrb[0].mxu0 %v1236
  %v1437 = vpop.f32.mrb[0].mxu0
  %v1438 = vadd.f32 %v1305, %v1437
  %v1439 = vpop.f32.mrb[0].mxu0
  %v1440 = vpop.f32.mrb[0].mxu0
  %v1441 = vadd.f32 %v1305, %v1440
  %v1442 = vpop.f32.mrb[0].mxu0
  %1443 = vmatprep.mubr.bf16.mxu0 %v1239
  %1444 = vmatmul.mubr.bf16.gmra.mrb[0].mxu0 %v1238
  %v1445 = vpop.f32.mrb[0].mxu0
  %v1446 = vadd.f32 %v1305, %v1445
  %v1447 = vpop.f32.mrb[0].mxu0
  %v1448 = vpop.f32.mrb[0].mxu0
  %v1449 = vadd.f32 %v1305, %v1448
  %v1450 = vpop.f32.mrb[0].mxu0
  %1451 = vmatprep.mubr.bf16.mxu0 %v1241
  %1452 = vmatmul.mubr.bf16.gmra.mrb[0].mxu0 %v1240
  %v1453 = vpop.f32.mrb[0].mxu0
  %v1454 = vadd.f32 %v1305, %v1453
  %v1455 = vpop.f32.mrb[0].mxu0
  %v1456 = vpop.f32.mrb[0].mxu0
  %v1457 = vadd.f32 %v1305, %v1456
  %v1458 = vpop.f32.mrb[0].mxu0
  %1459 = vmatprep.mubr.bf16.mxu0 %v1243
  %1460 = vmatmul.mubr.bf16.gmra.mrb[0].mxu0 %v1242
  %v1461 = vpop.f32.mrb[0].mxu0
  %v1462 = vadd.f32 %v1305, %v1461
  %v1463 = vpop.f32.mrb[0].mxu0
  %v1464 = vpop.f32.mrb[0].mxu0
  %v1465 = vadd.f32 %v1305, %v1464
  %v1466 = vpop.f32.mrb[0].mxu0
  %1467 = vmatprep.mubr.bf16.mxu0 %v1245
  %1468 = vmatmul.mubr.bf16.gmra.mrb[0].mxu0 %v1244
  %v1469 = vpop.f32.mrb[0].mxu0
  %v1470 = vadd.f32 %v1305, %v1469
  %v1471 = vpop.f32.mrb[0].mxu0
  %v1472 = vpop.f32.mrb[0].mxu0
  %v1473 = vadd.f32 %v1305, %v1472
  %v1474 = vpop.f32.mrb[0].mxu0
  %1475 = vmatprep.mubr.bf16.mxu0 %v1247
  %1476 = vmatmul.mubr.bf16.gmra.mrb[0].mxu0 %v1246
  %v1477 = vpop.f32.mrb[0].mxu0
  %v1478 = vadd.f32 %v1305, %v1477
  %v1479 = vpop.f32.mrb[0].mxu0
  %v1480 = vpop.f32.mrb[0].mxu0
  %v1481 = vadd.f32 %v1305, %v1480
  %v1482 = vpop.f32.mrb[0].mxu0
  %1483 = vmatprep.mubr.bf16.mxu0 %v1249
  %1484 = vmatmul.mubr.bf16.gmra.mrb[0].mxu0 %v1248
  %v1485 = vpop.f32.mrb[0].mxu0
  %v1486 = vadd.f32 %v1305, %v1485
  %v1487 = vpop.f32.mrb[0].mxu0
  %v1488 = vpop.f32.mrb[0].mxu0
  %v1489 = vadd.f32 %v1305, %v1488
  %v1490 = vpop.f32.mrb[0].mxu0
  %1491 = vmatprep.mubr.bf16.mxu0 %v1251
  %1492 = vmatmul.mubr.bf16.gmra.mrb[0].mxu0 %v1250
  %v1493 = vpop.f32.mrb[0].mxu0
  %v1494 = vadd.f32 %v1305, %v1493
  %v1495 = vpop.f32.mrb[0].mxu0
  %v1496 = vpop.f32.mrb[0].mxu0
  %v1497 = vadd.f32 %v1305, %v1496
  %v1498 = vpop.f32.mrb[0].mxu0
  %1499 = vmatprep.mubr.bf16.mxu0 %v1253
  %1500 = vmatmul.mubr.bf16.gmra.mrb[0].mxu0 %v1252
  %v1501 = vpop.f32.mrb[0].mxu0
  %v1502 = vadd.f32 %v1305, %v1501
  %v1503 = vpop.f32.mrb[0].mxu0
  %v1504 = vpop.f32.mrb[0].mxu0
  %v1505 = vadd.f32 %v1305, %v1504
  %v1506 = vpop.f32.mrb[0].mxu0
  %1507 = vmatprep.mubr.bf16.mxu0 %v1255
  %1508 = vmatmul.mubr.bf16.gmra.mrb[0].mxu0 %v1254
  %v1509 = vpop.f32.mrb[0].mxu0
  %v1510 = vadd.f32 %v1305, %v1509
  %v1511 = vpop.f32.mrb[0].mxu0
  %v1512 = vpop.f32.mrb[0].mxu0
  %v1513 = vadd.f32 %v1305, %v1512
  %v1514 = vpop.f32.mrb[0].mxu0
  %1515 = vmatprep.mubr.bf16.mxu0 %v1257
  %1516 = vmatmul.mubr.bf16.gmra.mrb[0].mxu0 %v1256
  %v1517 = vpop.f32.mrb[0].mxu0
  %v1518 = vadd.f32 %v1305, %v1517
  %v1519 = vpop.f32.mrb[0].mxu0
  %v1520 = vpop.f32.mrb[0].mxu0
  %v1521 = vadd.f32 %v1305, %v1520
  %v1522 = vpop.f32.mrb[0].mxu0
  %1523 = vmatprep.mubr.bf16.mxu0 %v1259
  %1524 = vmatmul.mubr.bf16.gmra.mrb[0].mxu0 %v1258
  %v1525 = vpop.f32.mrb[0].mxu0
  %v1526 = vadd.f32 %v1305, %v1525
  %v1527 = vpop.f32.mrb[0].mxu0
  %v1528 = vpop.f32.mrb[0].mxu0
  %v1529 = vadd.f32 %v1305, %v1528
  %v1530 = vpop.f32.mrb[0].mxu0
  %1531 = vmatprep.mubr.bf16.mxu0 %v1261
  %1532 = vmatmul.mubr.bf16.gmra.mrb[0].mxu0 %v1260
  %v1533 = vpop.f32.mrb[0].mxu0
  %v1534 = vadd.f32 %v1305, %v1533
  %v1535 = vpop.f32.mrb[0].mxu0
  %v1536 = vpop.f32.mrb[0].mxu0
  %v1537 = vadd.f32 %v1305, %v1536
  %v1538 = vpop.f32.mrb[0].mxu0
  %1539 = vmatprep.mubr.bf16.mxu0 %v1263
  %1540 = vmatmul.mubr.bf16.gmra.mrb[0].mxu0 %v1262
  %v1541 = vpop.f32.mrb[0].mxu0
  %v1542 = vadd.f32 %v1305, %v1541
  %v1543 = vpop.f32.mrb[0].mxu0
  %v1544 = vpop.f32.mrb[0].mxu0
  %v1545 = vadd.f32 %v1305, %v1544
  %v1546 = vpop.f32.mrb[0].mxu0
  %1547 = vmatprep.mubr.bf16.mxu0 %v1265
  %1548 = vmatmul.mubr.bf16.gmra.mrb[0].mxu0 %v1264
  %v1549 = vpop.f32.mrb[0].mxu0
  %v1550 = vadd.f32 %v1305, %v1549
  %v1551 = vpop.f32.mrb[0].mxu0
  %v1552 = vpop.f32.mrb[0].mxu0
  %v1553 = vadd.f32 %v1305, %v1552
  %v1554 = vpop.f32.mrb[0].mxu0
  %1555 = vmatprep.mubr.bf16.mxu0 %v1267
  %1556 = vmatmul.mubr.bf16.gmra.mrb[0].mxu0 %v1266
  %v1557 = vpop.f32.mrb[0].mxu0
  %v1558 = vadd.f32 %v1305, %v1557
  %v1559 = vpop.f32.mrb[0].mxu0
  %v1560 = vpop.f32.mrb[0].mxu0
  %v1561 = vadd.f32 %v1305, %v1560
  %v1562 = vpop.f32.mrb[0].mxu0
  %1563 = vdwg.mxu0
  %1564 = vst [vmem:[%s9] sm:$0xff] %v1438
  %1565 = vst [vmem:[%s9 + $0x8] sm:$0xff] %v1441
  %1566 = vst [vmem:[%s9 + $0x10] sm:$0xff] %v1446
  %1567 = vst [vmem:[%s9 + $0x18] sm:$0xff] %v1449
  %1568 = vst [vmem:[%s9 + $0x20] sm:$0xff] %v1454
  %1569 = vst [vmem:[%s9 + $0x28] sm:$0xff] %v1457
  %1570 = vst [vmem:[%s9 + $0x30] sm:$0xff] %v1462
  %1571 = vst [vmem:[%s9 + $0x38] sm:$0xff] %v1465
  %1572 = vst [vmem:[%s9 + $0x40] sm:$0xff] %v1470
  %1573 = vst [vmem:[%s9 + $0x48] sm:$0xff] %v1473
  %1574 = vst [vmem:[%s9 + $0x50] sm:$0xff] %v1478
  %1575 = vst [vmem:[%s9 + $0x58] sm:$0xff] %v1481
  %1576 = vst [vmem:[%s9 + $0x60] sm:$0xff] %v1486
  %1577 = vst [vmem:[%s9 + $0x68] sm:$0xff] %v1489
  %1578 = vst [vmem:[%s9 + $0x70] sm:$0xff] %v1494
  %1579 = vst [vmem:[%s9 + $0x78] sm:$0xff] %v1497
  %1580 = vst [vmem:[%s9 + $0x80] sm:$0xff] %v1502
  %1581 = vst [vmem:[%s9 + $0x88] sm:$0xff] %v1505
  %1582 = vst [vmem:[%s9 + $0x90] sm:$0xff] %v1510
  %1583 = vst [vmem:[%s9 + $0x98] sm:$0xff] %v1513
  %1584 = vst [vmem:[%s9 + $0xa0] sm:$0xff] %v1518
  %1585 = vst [vmem:[%s9 + $0xa8] sm:$0xff] %v1521
  %1586 = vst [vmem:[%s9 + $0xb0] sm:$0xff] %v1526
  %1587 = vst [vmem:[%s9 + $0xb8] sm:$0xff] %v1529
  %1588 = vst [vmem:[%s9 + $0xc0] sm:$0xff] %v1534
  %1589 = vst [vmem:[%s9 + $0xc8] sm:$0xff] %v1537
  %1590 = vst [vmem:[%s9 + $0xd0] sm:$0xff] %v1542
  %1591 = vst [vmem:[%s9 + $0xd8] sm:$0xff] %v1545
  %1592 = vst [vmem:[%s9 + $0xe0] sm:$0xff] %v1550
  %1593 = vst [vmem:[%s9 + $0xe8] sm:$0xff] %v1553
  %1594 = vst [vmem:[%s9 + $0xf0] sm:$0xff] %v1558
  %1595 = vst [vmem:[%s9 + $0xf8] sm:$0xff] %v1561
  // Predicated region
  $region38: #{_forward_padded.1} parent=0 // pred_check
    _
  $region39: #{_forward_padded.1} parent=0 // pred_check_branch
    %1597 = sbr.rel (0) target = $region41
  $region40: #{_forward_padded.1} parent=0 // pred_region
    _
  $region41: #{_forward_padded.1} parent=0 // pred_fallthru
    _
  // Predicated region
  $region42: #{_forward_padded.1} parent=0 // pred_check
    _
  $region43: #{_forward_padded.1} parent=0 // pred_check_branch
    %1599 = sbr.rel (0) target = $region45
  $region44: #{_forward_padded.1} parent=0 // pred_region
    _
  $region45: #{_forward_padded.1} parent=0 // pred_fallthru
    _

</llo_original>
